<compile_context>
chip_gen: v7x
topology: tpu7x:2x2x1
jax: 0.10.0
libtpu: 0.0.40
codegen_flags: <defaults>
</compile_context>

<pallas_src>
from functools import partial

import jax
import jax.numpy as jnp
from jax.experimental import pallas as pl
from jax.experimental.pallas import tpu as pltpu


def encoder_kernel(xyT_ref, w1_ref, b1_ref, w2_ref, b2_ref, wh_ref, bh_ref,
                   outT_ref, *, d_z, precision):
    """One batch tile, transposed layout: batch lives on the lane (last) dim.

    xyT:  (dim_xy, tile_b)   w1: (hidden, dim_xy)   b1: (hidden, 1)
    hT:   (hidden, tile_b)   w2: (hidden, hidden)   b2: (hidden, 1)
    outT: (2*d_z,  tile_b) = [mu ; clamp(logv, -5, 5)]   wh: (2*d_z, hidden)
    """
    cdt = w1_ref.dtype  # MXU input dtype (f32 or bf16); accumulation is f32

    # Layer 1: Linear + ReLU   (hidden, dim_xy) @ (dim_xy, tile_b)
    h = jnp.dot(w1_ref[...], xyT_ref[...].astype(cdt),
                preferred_element_type=jnp.float32, precision=precision)
    h = jnp.maximum(h + b1_ref[...], 0.0)

    # Layer 2: Linear + ReLU   (hidden, hidden) @ (hidden, tile_b)
    h = jnp.dot(w2_ref[...], h.astype(cdt),
                preferred_element_type=jnp.float32, precision=precision)
    h = jnp.maximum(h + b2_ref[...], 0.0)

    # Fused head: (2*d_z, hidden) @ (hidden, tile_b) -> rows [mu ; logv].
    y = jnp.dot(wh_ref[...], h.astype(cdt),
                preferred_element_type=jnp.float32, precision=precision)
    y = y + bh_ref[...]
    # Clamp only the logv rows (sublane index >= d_z).
    row = jax.lax.broadcasted_iota(jnp.int32, y.shape, 0)
    y = jnp.where(row >= d_z, jnp.clip(y, -5.0, 5.0), y)
    outT_ref[...] = y.astype(outT_ref.dtype)


def _round_up(x, m):
    return ((x + m - 1) // m) * m


def _choose_tiling(B, *, lane=128, max_tile=1024, min_tiles=2):
    """Lane-granular batch tiles: as large as allowed (amortize the ~0.35 us
    grid-step overhead), >= min_tiles tiles when B is large enough so the
    "parallel" grid axis gives both v7x TensorCores work, minimal padding."""
    B_pad = _round_up(B, lane)
    n_tiles = max(min_tiles, pl.cdiv(B_pad, max_tile))
    if B_pad < min_tiles * lane:              # too small to split across cores
        n_tiles = pl.cdiv(B_pad, lane)
    tile_b = max(lane, min(max_tile, _round_up(pl.cdiv(B_pad, n_tiles), lane)))
    B_pad = _round_up(B_pad, tile_b)
    return tile_b, B_pad


def prepare_params(params, *, compute_dtype=jnp.float32):
    """One-time conversion of PyTorch-layout params into kernel params.

    Hoisted out of the forward pass: mu/logv weights fused into a single
    (2*d_z, hidden) head, optional bf16 cast of the matmul operands (biases
    stay f32, accumulation stays f32 inside the kernel).
    """
    w_head = jnp.concatenate([params["wmu"], params["wlv"]], axis=0)
    b_head = jnp.concatenate([params["bmu"], params["blv"]], axis=0)
    return dict(
        w1=params["w1"].astype(compute_dtype),
        b1=params["b1"].reshape(-1, 1).astype(jnp.float32),
        w2=params["w2"].astype(compute_dtype),
        b2=params["b2"].reshape(-1, 1).astype(jnp.float32),
        w_head=w_head.astype(compute_dtype),
        b_head=b_head.reshape(-1, 1).astype(jnp.float32),
        d_z=int(params["wmu"].shape[0]),
    )


def encoder_forward(xy, kp, *, max_tile_b=1024):
    """Full encoder forward as one grid-pipelined Pallas kernel.

    xy: (B, dim_xy).  kp: output of `prepare_params`.
    Returns (mu, logv), each (B, d_z) float32.
    """
    B, dim_xy = xy.shape
    hidden = kp["w1"].shape[0]
    d_z = kp["d_z"]
    d_out = 2 * d_z
    cdt = kp["w1"].dtype
    item = jnp.dtype(cdt).itemsize

    tile_b, B_pad = _choose_tiling(B, max_tile=max_tile_b)
    grid = (B_pad // tile_b,)

    # Batch-on-lanes layout: (dim_xy, B_pad). Contiguous input DMA rows and
    # full-lane output stores; mu/logv come back as rows of the output slab.
    xyT = xy.T.astype(cdt)
    if B_pad != B:
        xyT = jnp.pad(xyT, ((0, 0), (0, B_pad - B)))

    precision = (jax.lax.Precision.HIGHEST if cdt == jnp.float32
                 else jax.lax.Precision.DEFAULT)

    weight_bytes = ((dim_xy * hidden + hidden * hidden + hidden * d_out) * item
                    + (2 * hidden + d_out) * 4)
    flops = 2 * B_pad * hidden * (dim_xy + hidden + d_out)
    bytes_accessed = dim_xy * B_pad * item + d_out * B_pad * 4 + weight_bytes
    cost = pl.CostEstimate(flops=flops, transcendentals=0,
                           bytes_accessed=bytes_accessed)

    # Only pin the VMEM budget when the working set could exceed the tightest
    # default scoped limit (v5e: 16 MiB). No-op at these shapes.
    vmem_needed = (2 * weight_bytes                                  # dbl-buffered weights
                   + 2 * (dim_xy * tile_b * item + d_out * tile_b * 4)  # in/out tiles x2
                   + 4 * hidden * tile_b * 4)                        # intermediates headroom
    extra = {}
    if vmem_needed > 12 * 1024 * 1024:
        extra["vmem_limit_bytes"] = int(min(60 * 1024 * 1024,
                                            _round_up(2 * vmem_needed, 1 << 20)))

    outT = pl.pallas_call(
        partial(encoder_kernel, d_z=d_z, precision=precision),
        out_shape=jax.ShapeDtypeStruct((d_out, B_pad), jnp.float32),
        grid=grid,
        in_specs=[
            # Activation stream: tiled over the batch (lane dim), pipelined.
            pl.BlockSpec((dim_xy, tile_b), lambda i: (0, i)),
            # Weights / biases: same block every step -> DMA'd once, resident.
            pl.BlockSpec((hidden, dim_xy), lambda i: (0, 0)),
            pl.BlockSpec((hidden, 1), lambda i: (0, 0)),
            pl.BlockSpec((hidden, hidden), lambda i: (0, 0)),
            pl.BlockSpec((hidden, 1), lambda i: (0, 0)),
            pl.BlockSpec((d_out, hidden), lambda i: (0, 0)),
            pl.BlockSpec((d_out, 1), lambda i: (0, 0)),
        ],
        out_specs=pl.BlockSpec((d_out, tile_b), lambda i: (0, i)),
        compiler_params=pltpu.CompilerParams(
            dimension_semantics=("parallel",), **extra),
        cost_estimate=cost,
    )(xyT, kp["w1"], kp["b1"], kp["w2"], kp["b2"], kp["w_head"], kp["b_head"])

    mu = outT[:d_z, :B].T
    logv = outT[d_z:, :B].T
    return mu, logv


def init_params(key, dim_xy, d_z, hidden):
    """Deterministic synthetic params, PyTorch Linear layout/init: W (out,in)."""
    ks = jax.random.split(key, 8)

    def linear(kw, kb, fan_in, fan_out):
        bound = 1.0 / float(fan_in) ** 0.5
        w = jax.random.uniform(kw, (fan_out, fan_in), jnp.float32, -bound, bound)
        b = jax.random.uniform(kb, (fan_out,), jnp.float32, -bound, bound)
        return w, b

    w1, b1 = linear(ks[0], ks[1], dim_xy, hidden)
    w2, b2 = linear(ks[2], ks[3], hidden, hidden)
    wmu, bmu = linear(ks[4], ks[5], hidden, d_z)
    wlv, blv = linear(ks[6], ks[7], hidden, d_z)
    return dict(w1=w1, b1=b1, w2=w2, b2=b2,
                wmu=wmu, bmu=bmu, wlv=wlv, blv=blv)


def encoder_ref(xy, p):
    """Pure-JAX reference (f32, highest precision)."""
    hp = jax.lax.Precision.HIGHEST
    h = jnp.maximum(jnp.dot(xy, p["w1"].T, precision=hp) + p["b1"], 0.0)
    h = jnp.maximum(jnp.dot(h, p["w2"].T, precision=hp) + p["b2"], 0.0)
    mu = jnp.dot(h, p["wmu"].T, precision=hp) + p["bmu"]
    logv = jnp.clip(jnp.dot(h, p["wlv"].T, precision=hp) + p["blv"], -5.0, 5.0)
    return mu, logv


if __name__ == "__main__":
    # Small shapes consistent with the module: dim_xy = d_x + 1 (x concat y).
    B, dim_xy, d_z, hidden = 8, 9, 4, 32

    key = jax.random.PRNGKey(0)
    k_x, k_p = jax.random.split(key)
    xy = jax.random.normal(k_x, (B, dim_xy), dtype=jnp.float32)
    params = init_params(k_p, dim_xy, d_z, hidden)

    # --- f32 compute path: tight check against the reference --------------
    kp32 = prepare_params(params, compute_dtype=jnp.float32)
    mu, logv = encoder_forward(xy, kp32)
    jax.block_until_ready((mu, logv))

    mu_ref, logv_ref = encoder_ref(xy, params)
    assert mu.shape == (B, d_z) and logv.shape == (B, d_z), "shape mismatch"
    assert jnp.allclose(mu, mu_ref, atol=1e-4, rtol=1e-4), "mu mismatch"
    assert jnp.allclose(logv, logv_ref, atol=1e-4, rtol=1e-4), "logv mismatch"
    assert jnp.all(logv <= 5.0) and jnp.all(logv >= -5.0), "clamp failed"

    # --- multi-tile grid (padded batch), still f32 ------------------------
    B2 = 300
    xy2 = jax.random.normal(jax.random.PRNGKey(1), (B2, dim_xy), jnp.float32)
    mu2, logv2 = encoder_forward(xy2, kp32, max_tile_b=256)
    jax.block_until_ready((mu2, logv2))
    mu2_ref, logv2_ref = encoder_ref(xy2, params)
    assert mu2.shape == (B2, d_z) and logv2.shape == (B2, d_z), "tiled shape"
    assert jnp.allclose(mu2, mu2_ref, atol=1e-4, rtol=1e-4), "mu (tiled) mismatch"
    assert jnp.allclose(logv2, logv2_ref, atol=1e-4, rtol=1e-4), "logv (tiled) mismatch"

    # --- bf16 streaming path (memory-bound win; relaxed tolerance) --------
    kp16 = prepare_params(params, compute_dtype=jnp.bfloat16)
    mu3, logv3 = encoder_forward(xy2, kp16)
    jax.block_until_ready((mu3, logv3))
    assert jnp.allclose(mu3, mu2_ref, atol=5e-2, rtol=5e-2), "mu (bf16) mismatch"
    assert jnp.allclose(logv3, logv2_ref, atol=5e-2, rtol=5e-2), "logv (bf16) mismatch"

    print("KERNEL_OK")
</pallas_src>

<mosaic_0001>
module attributes {stable_mosaic.version = 11 : i64} {
  func.func @encoder_kernel(%arg0: i32, %arg1: memref<9x128xf32, #tpu.memory_space<vmem>>, %arg2: memref<32x9xf32, #tpu.memory_space<vmem>>, %arg3: memref<32x1xf32, #tpu.memory_space<vmem>>, %arg4: memref<32x32xf32, #tpu.memory_space<vmem>>, %arg5: memref<32x1xf32, #tpu.memory_space<vmem>>, %arg6: memref<8x32xf32, #tpu.memory_space<vmem>>, %arg7: memref<8x1xf32, #tpu.memory_space<vmem>>, %arg8: memref<8x128xf32, #tpu.memory_space<vmem>>) attributes {dimension_semantics = [#tpu.dimension_semantics<parallel>], iteration_bounds = array<i64: 1>, scalar_prefetch = 0 : i64, scratch_operands = 0 : i64, tpu.core_type = #tpu.core_type<tc>, window_params = [{transform_indices = @transform_0, window_bounds = array<i64: 9, 128>}, {pipeline_mode = #tpu.pipeline_mode<synchronous>, transform_indices = @transform_1, window_bounds = array<i64: 32, 9>}, {pipeline_mode = #tpu.pipeline_mode<synchronous>, transform_indices = @transform_2, window_bounds = array<i64: 32, 1>}, {pipeline_mode = #tpu.pipeline_mode<synchronous>, transform_indices = @transform_3, window_bounds = array<i64: 32, 32>}, {pipeline_mode = #tpu.pipeline_mode<synchronous>, transform_indices = @transform_4, window_bounds = array<i64: 32, 1>}, {pipeline_mode = #tpu.pipeline_mode<synchronous>, transform_indices = @transform_5, window_bounds = array<i64: 8, 32>}, {pipeline_mode = #tpu.pipeline_mode<synchronous>, transform_indices = @transform_6, window_bounds = array<i64: 8, 1>}, {transform_indices = @transform_7, window_bounds = array<i64: 8, 128>}]} {
    %c0 = arith.constant 0 : index
    %c0_0 = arith.constant 0 : index
    %0 = vector.load %arg2[%c0, %c0_0] : memref<32x9xf32, #tpu.memory_space<vmem>>, vector<32x9xf32>
    %c0_1 = arith.constant 0 : index
    %c0_2 = arith.constant 0 : index
    %1 = vector.load %arg1[%c0_1, %c0_2] : memref<9x128xf32, #tpu.memory_space<vmem>>, vector<9x128xf32>
    %cst = arith.constant dense<0.000000e+00> : vector<32x128xf32>
    %2 = tpu.matmul %0, %1, %cst {dimension_numbers = #tpu.dot_dimension_numbers<[1], [0], [0], [1], [0, 0, 1, 1], [], []>, precision = #tpu.contract_precision<fp32>} : vector<32x9xf32>, vector<9x128xf32>, vector<32x128xf32> -> vector<32x128xf32>
    %c0_3 = arith.constant 0 : index
    %c0_4 = arith.constant 0 : index
    %3 = vector.load %arg3[%c0_3, %c0_4] : memref<32x1xf32, #tpu.memory_space<vmem>>, vector<32x1xf32>
    %4 = vector.broadcast %3 : vector<32x1xf32> to vector<32x128xf32>
    %5 = arith.addf %2, %4 : vector<32x128xf32>
    %cst_5 = arith.constant 0.000000e+00 : f32
    %6 = vector.broadcast %cst_5 : f32 to vector<32x128xf32>
    %7 = arith.maximumf %5, %6 : vector<32x128xf32>
    %c0_6 = arith.constant 0 : index
    %c0_7 = arith.constant 0 : index
    %8 = vector.load %arg4[%c0_6, %c0_7] : memref<32x32xf32, #tpu.memory_space<vmem>>, vector<32x32xf32>
    %cst_8 = arith.constant dense<0.000000e+00> : vector<32x128xf32>
    %9 = tpu.matmul %8, %7, %cst_8 {dimension_numbers = #tpu.dot_dimension_numbers<[1], [0], [0], [1], [0, 0, 1, 1], [], []>, precision = #tpu.contract_precision<fp32>} : vector<32x32xf32>, vector<32x128xf32>, vector<32x128xf32> -> vector<32x128xf32>
    %c0_9 = arith.constant 0 : index
    %c0_10 = arith.constant 0 : index
    %10 = vector.load %arg5[%c0_9, %c0_10] : memref<32x1xf32, #tpu.memory_space<vmem>>, vector<32x1xf32>
    %11 = vector.broadcast %10 : vector<32x1xf32> to vector<32x128xf32>
    %12 = arith.addf %9, %11 : vector<32x128xf32>
    %cst_11 = arith.constant 0.000000e+00 : f32
    %13 = vector.broadcast %cst_11 : f32 to vector<32x128xf32>
    %14 = arith.maximumf %12, %13 : vector<32x128xf32>
    %c0_12 = arith.constant 0 : index
    %c0_13 = arith.constant 0 : index
    %15 = vector.load %arg6[%c0_12, %c0_13] : memref<8x32xf32, #tpu.memory_space<vmem>>, vector<8x32xf32>
    %cst_14 = arith.constant dense<0.000000e+00> : vector<8x128xf32>
    %16 = tpu.matmul %15, %14, %cst_14 {dimension_numbers = #tpu.dot_dimension_numbers<[1], [0], [0], [1], [0, 0, 1, 1], [], []>, precision = #tpu.contract_precision<fp32>} : vector<8x32xf32>, vector<32x128xf32>, vector<8x128xf32> -> vector<8x128xf32>
    %c0_15 = arith.constant 0 : index
    %c0_16 = arith.constant 0 : index
    %17 = vector.load %arg7[%c0_15, %c0_16] : memref<8x1xf32, #tpu.memory_space<vmem>>, vector<8x1xf32>
    %18 = vector.broadcast %17 : vector<8x1xf32> to vector<8x128xf32>
    %19 = arith.addf %16, %18 : vector<8x128xf32>
    %20 = tpu.iota {dimensions = array<i32: 0>} : vector<8x128xi32>
    %c4_i32 = arith.constant 4 : i32
    %21 = vector.broadcast %c4_i32 : i32 to vector<8x128xi32>
    %22 = arith.cmpi sge, %20, %21 : vector<8x128xi32>
    %cst_17 = arith.constant -5.000000e+00 : f32
    %cst_18 = arith.constant 5.000000e+00 : f32
    %23 = vector.broadcast %cst_17 : f32 to vector<8x128xf32>
    %24 = arith.maximumf %23, %19 : vector<8x128xf32>
    %25 = vector.broadcast %cst_18 : f32 to vector<8x128xf32>
    %26 = arith.minimumf %25, %24 : vector<8x128xf32>
    %27 = arith.select %22, %26, %19 : vector<8x128xi1>, vector<8x128xf32>
    %c0_19 = arith.constant 0 : index
    %c0_20 = arith.constant 0 : index
    %28 = vector.load %arg8[%c0_19, %c0_20] : memref<8x128xf32, #tpu.memory_space<vmem>>, vector<8x128xf32>
    tpu.vector_store %arg8[%c0_19, %c0_20], %27 {strides = array<i32>} : memref<8x128xf32, #tpu.memory_space<vmem>>, vector<8x128xf32>,
    return
  }
  func.func @transform_0(%arg0: i32) -> (i32, i32) {
    %c0_i32 = arith.constant 0 : i32
    %c0_i32_0 = arith.constant 0 : i32
    return %c0_i32, %arg0 : i32, i32
  }
  func.func @transform_1(%arg0: i32) -> (i32, i32) {
    %c0_i32 = arith.constant 0 : i32
    %c0_i32_0 = arith.constant 0 : i32
    %c0_i32_1 = arith.constant 0 : i32
    return %c0_i32, %c0_i32_0 : i32, i32
  }
  func.func @transform_2(%arg0: i32) -> (i32, i32) {
    %c0_i32 = arith.constant 0 : i32
    %c0_i32_0 = arith.constant 0 : i32
    %c0_i32_1 = arith.constant 0 : i32
    return %c0_i32, %c0_i32_0 : i32, i32
  }
  func.func @transform_3(%arg0: i32) -> (i32, i32) {
    %c0_i32 = arith.constant 0 : i32
    %c0_i32_0 = arith.constant 0 : i32
    %c0_i32_1 = arith.constant 0 : i32
    return %c0_i32, %c0_i32_0 : i32, i32
  }
  func.func @transform_4(%arg0: i32) -> (i32, i32) {
    %c0_i32 = arith.constant 0 : i32
    %c0_i32_0 = arith.constant 0 : i32
    %c0_i32_1 = arith.constant 0 : i32
    return %c0_i32, %c0_i32_0 : i32, i32
  }
  func.func @transform_5(%arg0: i32) -> (i32, i32) {
    %c0_i32 = arith.constant 0 : i32
    %c0_i32_0 = arith.constant 0 : i32
    %c0_i32_1 = arith.constant 0 : i32
    return %c0_i32, %c0_i32_0 : i32, i32
  }
  func.func @transform_6(%arg0: i32) -> (i32, i32) {
    %c0_i32 = arith.constant 0 : i32
    %c0_i32_0 = arith.constant 0 : i32
    %c0_i32_1 = arith.constant 0 : i32
    return %c0_i32, %c0_i32_0 : i32, i32
  }
  func.func @transform_7(%arg0: i32) -> (i32, i32) {
    %c0_i32 = arith.constant 0 : i32
    %c0_i32_0 = arith.constant 0 : i32
    return %c0_i32, %arg0 : i32, i32
  }
}

</mosaic_0001>

<llo_original>
// kernel: tpu_custom_call.1
$region0: #{tpu_custom_call.1}
  #allocation0 [shape = 'u32[]', space=smem, size = 0x4, offset = 0x4, fixed_abs, tag = 'smem constant byte address 0x4 - core index']
  #allocation1 [shape = 'u32[144,128]{1,0:T(1,128)}', space=vmem, size = 0x12000, scoped, tag = 'internal scratch']
  %s0 = inlined_call_operand.vmem [shape: f32[9,128], index: 0, kind: input, shape index: {}]
  %s1 = inlined_call_operand.vmem [shape: f32[32,9], index: 1, kind: input, shape index: {}]
  %s2 = inlined_call_operand.vmem [shape: f32[32,1], index: 2, kind: input, shape index: {}]
  %s3 = inlined_call_operand.vmem [shape: f32[32,32], index: 3, kind: input, shape index: {}]
  %s4 = inlined_call_operand.vmem [shape: f32[32,1], index: 4, kind: input, shape index: {}]
  %s5 = inlined_call_operand.vmem [shape: f32[8,32], index: 5, kind: input, shape index: {}]
  %s6 = inlined_call_operand.vmem [shape: f32[8,1], index: 6, kind: input, shape index: {}]
  %s7 = inlined_call_operand.hbm [shape: f32[8,128], index: 7, kind: output, shape index: {}]
  %s8 = sld [smem:[#allocation0]]
  $region38: #{tpu_custom_call.1} parent=0
    _
  %s10 = ssub.s32 1, %s8
  %s11 = scalar_select 0, %s10, %s8
  $region1: #{tpu_custom_call.1} parent=0
    #allocation2 [shape = 'u8[4096]{0}', space=vmem, size = 0x1000, scoped, tag = 'output window, operand 0, single buffered']
    #allocation3 [shape = 's32[1]{0}', space=sflag, size = 0x4, scoped, tag = 'scoped memory for tpu_custom_call.1']
    %12 = vsyncpa [#allocation3], 0
    // Predicated region
    $region2: #{tpu_custom_call.1} parent=1 // pred_check
      _
    $region3: #{tpu_custom_call.1} parent=1 // pred_check_branch
      %14 = sbr.rel (0) target = $region5
    $region4: #{tpu_custom_call.1} parent=1 // pred_region
      _
    $region5: #{tpu_custom_call.1} parent=1 // pred_fallthru
      _
    // Predicated region
    $region6: #{tpu_custom_call.1} parent=1 // pred_check
      _
    $region7: #{tpu_custom_call.1} parent=1 // pred_check_branch
      %16 = sbr.rel (0) target = $region9
    $region8: #{tpu_custom_call.1} parent=1 // pred_region
      _
    $region9: #{tpu_custom_call.1} parent=1 // pred_fallthru
      _
    // Predicated region
    $region10: #{tpu_custom_call.1} parent=1 // pred_check
      _
    $region11: #{tpu_custom_call.1} parent=1 // pred_check_branch
      %18 = sbr.rel (0) target = $region13
    $region12: #{tpu_custom_call.1} parent=1 // pred_region
      _
    $region13: #{tpu_custom_call.1} parent=1 // pred_fallthru
      _
    // Predicated region
    $region14: #{tpu_custom_call.1} parent=1 // pred_check
      _
    $region15: #{tpu_custom_call.1} parent=1 // pred_check_branch
      %20 = sbr.rel (0) target = $region17
    $region16: #{tpu_custom_call.1} parent=1 // pred_region
      _
    $region17: #{tpu_custom_call.1} parent=1 // pred_fallthru
      _
    // Predicated region
    $region18: #{tpu_custom_call.1} parent=1 // pred_check
      _
    $region19: #{tpu_custom_call.1} parent=1 // pred_check_branch
      %22 = sbr.rel (0) target = $region21
    $region20: #{tpu_custom_call.1} parent=1 // pred_region
      _
    $region21: #{tpu_custom_call.1} parent=1 // pred_fallthru
      _
    // Predicated region
    $region22: #{tpu_custom_call.1} parent=1 // pred_check
      _
    $region23: #{tpu_custom_call.1} parent=1 // pred_check_branch
      %24 = sbr.rel (0) target = $region25
    $region24: #{tpu_custom_call.1} parent=1 // pred_region
      _
    $region25: #{tpu_custom_call.1} parent=1 // pred_fallthru
      _
    // Predicated region
    $region26: #{tpu_custom_call.1} parent=1 // pred_check
      _
    $region27: #{tpu_custom_call.1} parent=1 // pred_check_branch
      %26 = sbr.rel (0) target = $region29
    $region28: #{tpu_custom_call.1} parent=1 // pred_region
      _
    $region29: #{tpu_custom_call.1} parent=1 // pred_fallthru
      _
    %v27 = vld [vmem:[%s1] sm:$0xff]
    %v28 = vld [vmem:[%s1 + $0x8] sm:$0xff]
    %v29 = vld [vmem:[%s1 + $0x10] sm:$0xff]
    %v30 = vld [vmem:[%s1 + $0x18] sm:$0xff]
    %v31 = vld [vmem:[%s0] sm:$0xff]
    %v32 = vld [vmem:[%s0 + $0x8] sm:$0x1]
    %v33 = vld [vmem:[%s2] sm:$0xff]
    %v34 = vld [vmem:[%s2 + $0x8] sm:$0xff]
    %v35 = vld [vmem:[%s2 + $0x10] sm:$0xff]
    %v36 = vld [vmem:[%s2 + $0x18] sm:$0xff]
    %38 = vset.pattern.permute.xlu0 0
    %39 = vperm.xlu0 %38, %v33
    %v40 = vpop.permute.xlu0 %39
    %43 = vset.pattern.permute.xlu0 0
    %44 = vperm.xlu0 %43, %v34
    %v45 = vpop.permute.xlu0 %44
    %48 = vset.pattern.permute.xlu0 0
    %49 = vperm.xlu0 %48, %v35
    %v50 = vpop.permute.xlu0 %49
    %53 = vset.pattern.permute.xlu0 0
    %54 = vperm.xlu0 %53, %v36
    %v55 = vpop.permute.xlu0 %54
    %vm57 = vcmask 72704
    %v59 = vsel %vm57, %v27, 0
    %v62 = vsel %vm57, %v28, 0
    %v65 = vsel %vm57, %v29, 0
    %v68 = vsel %vm57, %v30, 0
    %vm70 = vcmask 1040384
    %v72 = vsel %vm70, %v32, 0
    %74 = vmatprep.subr.mxu0 0.0
    %v75 = vand.u32 %v31, 4294901760
    %76 = vmatpush1.msra.mxu0 %v75
    %77 = vmatprep.subr.mxu0 0.0
    %v78 = vand.u32 %v72, 4294901760
    %79 = vmatpush1.msra.mxu0 %v78
    %80 = vmatprep.subr.mxu0 0.0
    %81 = vmatpush1.msra.mxu0 0.0
    %82 = vmatprep.subr.mxu0 0.0
    %83 = vmatpush1.msra.mxu0 0.0
    %84 = vmatprep.subr.mxu0 0.0
    %85 = vmatpush1.msra.mxu0 0.0
    %86 = vmatprep.subr.mxu0 0.0
    %87 = vmatpush1.msra.mxu0 0.0
    %88 = vmatprep.subr.mxu0 0.0
    %89 = vmatpush1.msra.mxu0 0.0
    %90 = vmatprep.subr.mxu0 0.0
    %91 = vmatpush1.msra.mxu0 0.0
    %92 = vmatprep.subr.mxu0 0.0
    %93 = vmatpush1.msra.mxu0 0.0
    %94 = vmatprep.subr.mxu0 0.0
    %95 = vmatpush1.msra.mxu0 0.0
    %96 = vmatprep.subr.mxu0 0.0
    %97 = vmatpush1.msra.mxu0 0.0
    %98 = vmatprep.subr.mxu0 0.0
    %99 = vmatpush1.msra.mxu0 0.0
    %100 = vmatprep.subr.mxu0 0.0
    %101 = vmatpush1.msra.mxu0 0.0
    %102 = vmatprep.subr.mxu0 0.0
    %103 = vmatpush1.msra.mxu0 0.0
    %104 = vmatprep.subr.mxu0 0.0
    %105 = vmatpush1.msra.mxu0 0.0
    %106 = vmatprep.subr.mxu0 0.0
    %107 = vmatpush1.msra.mxu0 0.0
    %108 = vmatprep.subr.mxu0 0.0
    %109 = vmatpush1.msra.mxu0 0.0
    %110 = vmatprep.subr.mxu0 0.0
    %111 = vmatpush1.msra.mxu0 0.0
    %112 = vmatprep.subr.mxu0 0.0
    %113 = vmatpush1.msra.mxu0 0.0
    %114 = vmatprep.subr.mxu0 0.0
    %115 = vmatpush1.msra.mxu0 0.0
    %116 = vmatprep.subr.mxu0 0.0
    %117 = vmatpush1.msra.mxu0 0.0
    %118 = vmatprep.subr.mxu0 0.0
    %119 = vmatpush1.msra.mxu0 0.0
    %120 = vmatprep.subr.mxu0 0.0
    %121 = vmatpush1.msra.mxu0 0.0
    %122 = vmatprep.subr.mxu0 0.0
    %123 = vmatpush1.msra.mxu0 0.0
    %124 = vmatprep.subr.mxu0 0.0
    %125 = vmatpush1.msra.mxu0 0.0
    %126 = vmatprep.subr.mxu0 0.0
    %127 = vmatpush1.msra.mxu0 0.0
    %128 = vmatprep.subr.mxu0 0.0
    %129 = vmatpush1.msra.mxu0 0.0
    %130 = vmatprep.subr.mxu0 0.0
    %131 = vmatpush1.msra.mxu0 0.0
    %132 = vmatprep.subr.mxu0 0.0
    %133 = vmatpush1.msra.mxu0 0.0
    %134 = vmatprep.subr.mxu0 0.0
    %135 = vmatpush1.msra.mxu0 0.0
    %136 = vmatprep.subr.mxu0 0.0
    %137 = vmatpush1.msra.mxu0 0.0
    %138 = vmatprep.subr.mxu0 0.0
    %139 = vmatpush1.msra.mxu0 0.0
    %140 = vmatprep.mubr.f32.mxu0 0.0
    %v141 = vand.u32 %v59, 4294901760
    %v142 = vsub.f32 %v59, %v141
    %v143 = vand.u32 %v142, 4294901760
    %v144 = vsub.f32 %v142, %v143
    %v145 = vand.u32 %v144, 4294901760
    %146 = vmatmul.mubr.f32.gmra.mrb[0].mxu0 %v145
    %v147 = vpop.f32.mrb[0].mxu0
    %v148 = vadd.f32 %v40, %v147
    %v149 = vpop.f32.mrb[0].mxu0
    %150 = vmatprep.mubr.f32.mxu0 0.0
    %v151 = vand.u32 %v62, 4294901760
    %v152 = vsub.f32 %v62, %v151
    %v153 = vand.u32 %v152, 4294901760
    %v154 = vsub.f32 %v152, %v153
    %v155 = vand.u32 %v154, 4294901760
    %156 = vmatmul.mubr.f32.gmra.mrb[0].mxu0 %v155
    %v157 = vpop.f32.mrb[0].mxu0
    %v158 = vadd.f32 %v45, %v157
    %v159 = vpop.f32.mrb[0].mxu0
    %160 = vmatprep.mubr.f32.mxu0 0.0
    %v161 = vand.u32 %v65, 4294901760
    %v162 = vsub.f32 %v65, %v161
    %v163 = vand.u32 %v162, 4294901760
    %v164 = vsub.f32 %v162, %v163
    %v165 = vand.u32 %v164, 4294901760
    %166 = vmatmul.mubr.f32.gmra.mrb[0].mxu0 %v165
    %v167 = vpop.f32.mrb[0].mxu0
    %v168 = vadd.f32 %v50, %v167
    %v169 = vpop.f32.mrb[0].mxu0
    %170 = vmatprep.mubr.f32.mxu0 0.0
    %v171 = vand.u32 %v68, 4294901760
    %v172 = vsub.f32 %v68, %v171
    %v173 = vand.u32 %v172, 4294901760
    %v174 = vsub.f32 %v172, %v173
    %v175 = vand.u32 %v174, 4294901760
    %176 = vmatmul.mubr.f32.gmra.mrb[0].mxu0 %v175
    %v177 = vpop.f32.mrb[0].mxu0
    %v178 = vadd.f32 %v55, %v177
    %v179 = vpop.f32.mrb[0].mxu0
    %180 = vdwg.mxu0
    %181 = vmatprep.subr.mxu0 0.0
    %v182 = vand.u32 %v31, 4294901760
    %v183 = vsub.f32 %v31, %v182
    %v184 = vand.u32 %v183, 4294901760
    %v185 = vsub.f32 %v183, %v184
    %v186 = vand.u32 %v185, 4294901760
    %187 = vmatpush1.msra.mxu0 %v186
    %188 = vmatprep.subr.mxu0 0.0
    %v189 = vand.u32 %v72, 4294901760
    %v190 = vsub.f32 %v72, %v189
    %v191 = vand.u32 %v190, 4294901760
    %v192 = vsub.f32 %v190, %v191
    %v193 = vand.u32 %v192, 4294901760
    %194 = vmatpush1.msra.mxu0 %v193
    %195 = vmatprep.subr.mxu0 0.0
    %196 = vmatpush1.msra.mxu0 0.0
    %197 = vmatprep.subr.mxu0 0.0
    %198 = vmatpush1.msra.mxu0 0.0
    %199 = vmatprep.subr.mxu0 0.0
    %200 = vmatpush1.msra.mxu0 0.0
    %201 = vmatprep.subr.mxu0 0.0
    %202 = vmatpush1.msra.mxu0 0.0
    %203 = vmatprep.subr.mxu0 0.0
    %204 = vmatpush1.msra.mxu0 0.0
    %205 = vmatprep.subr.mxu0 0.0
    %206 = vmatpush1.msra.mxu0 0.0
    %207 = vmatprep.subr.mxu0 0.0
    %208 = vmatpush1.msra.mxu0 0.0
    %209 = vmatprep.subr.mxu0 0.0
    %210 = vmatpush1.msra.mxu0 0.0
    %211 = vmatprep.subr.mxu0 0.0
    %212 = vmatpush1.msra.mxu0 0.0
    %213 = vmatprep.subr.mxu0 0.0
    %214 = vmatpush1.msra.mxu0 0.0
    %215 = vmatprep.subr.mxu0 0.0
    %216 = vmatpush1.msra.mxu0 0.0
    %217 = vmatprep.subr.mxu0 0.0
    %218 = vmatpush1.msra.mxu0 0.0
    %219 = vmatprep.subr.mxu0 0.0
    %220 = vmatpush1.msra.mxu0 0.0
    %221 = vmatprep.subr.mxu0 0.0
    %222 = vmatpush1.msra.mxu0 0.0
    %223 = vmatprep.subr.mxu0 0.0
    %224 = vmatpush1.msra.mxu0 0.0
    %225 = vmatprep.subr.mxu0 0.0
    %226 = vmatpush1.msra.mxu0 0.0
    %227 = vmatprep.subr.mxu0 0.0
    %228 = vmatpush1.msra.mxu0 0.0
    %229 = vmatprep.subr.mxu0 0.0
    %230 = vmatpush1.msra.mxu0 0.0
    %231 = vmatprep.subr.mxu0 0.0
    %232 = vmatpush1.msra.mxu0 0.0
    %233 = vmatprep.subr.mxu0 0.0
    %234 = vmatpush1.msra.mxu0 0.0
    %235 = vmatprep.subr.mxu0 0.0
    %236 = vmatpush1.msra.mxu0 0.0
    %237 = vmatprep.subr.mxu0 0.0
    %238 = vmatpush1.msra.mxu0 0.0
    %239 = vmatprep.subr.mxu0 0.0
    %240 = vmatpush1.msra.mxu0 0.0
    %241 = vmatprep.subr.mxu0 0.0
    %242 = vmatpush1.msra.mxu0 0.0
    %243 = vmatprep.subr.mxu0 0.0
    %244 = vmatpush1.msra.mxu0 0.0
    %245 = vmatprep.subr.mxu0 0.0
    %246 = vmatpush1.msra.mxu0 0.0
    %247 = vmatprep.subr.mxu0 0.0
    %248 = vmatpush1.msra.mxu0 0.0
    %249 = vmatprep.subr.mxu0 0.0
    %250 = vmatpush1.msra.mxu0 0.0
    %251 = vmatprep.subr.mxu0 0.0
    %252 = vmatpush1.msra.mxu0 0.0
    %253 = vmatprep.subr.mxu0 0.0
    %254 = vmatpush1.msra.mxu0 0.0
    %255 = vmatprep.mubr.f32.mxu0 0.0
    %v256 = vand.u32 %v59, 4294901760
    %257 = vmatmul.mubr.f32.gmra.mrb[0].mxu0 %v256
    %v258 = vpop.f32.mrb[0].mxu0
    %v259 = vadd.f32 %v148, %v258
    %v260 = vpop.f32.mrb[0].mxu0
    %261 = vmatprep.mubr.f32.mxu0 0.0
    %v262 = vand.u32 %v62, 4294901760
    %263 = vmatmul.mubr.f32.gmra.mrb[0].mxu0 %v262
    %v264 = vpop.f32.mrb[0].mxu0
    %v265 = vadd.f32 %v158, %v264
    %v266 = vpop.f32.mrb[0].mxu0
    %267 = vmatprep.mubr.f32.mxu0 0.0
    %v268 = vand.u32 %v65, 4294901760
    %269 = vmatmul.mubr.f32.gmra.mrb[0].mxu0 %v268
    %v270 = vpop.f32.mrb[0].mxu0
    %v271 = vadd.f32 %v168, %v270
    %v272 = vpop.f32.mrb[0].mxu0
    %273 = vmatprep.mubr.f32.mxu0 0.0
    %v274 = vand.u32 %v68, 4294901760
    %275 = vmatmul.mubr.f32.gmra.mrb[0].mxu0 %v274
    %v276 = vpop.f32.mrb[0].mxu0
    %v277 = vadd.f32 %v178, %v276
    %v278 = vpop.f32.mrb[0].mxu0
    %279 = vdwg.mxu0
    %280 = vmatprep.subr.mxu0 0.0
    %v281 = vand.u32 %v31, 4294901760
    %v282 = vsub.f32 %v31, %v281
    %283 = vmatpush1.msra.mxu0 %v282
    %284 = vmatprep.subr.mxu0 0.0
    %v285 = vand.u32 %v72, 4294901760
    %v286 = vsub.f32 %v72, %v285
    %287 = vmatpush1.msra.mxu0 %v286
    %288 = vmatprep.subr.mxu0 0.0
    %289 = vmatpush1.msra.mxu0 0.0
    %290 = vmatprep.subr.mxu0 0.0
    %291 = vmatpush1.msra.mxu0 0.0
    %292 = vmatprep.subr.mxu0 0.0
    %293 = vmatpush1.msra.mxu0 0.0
    %294 = vmatprep.subr.mxu0 0.0
    %295 = vmatpush1.msra.mxu0 0.0
    %296 = vmatprep.subr.mxu0 0.0
    %297 = vmatpush1.msra.mxu0 0.0
    %298 = vmatprep.subr.mxu0 0.0
    %299 = vmatpush1.msra.mxu0 0.0
    %300 = vmatprep.subr.mxu0 0.0
    %301 = vmatpush1.msra.mxu0 0.0
    %302 = vmatprep.subr.mxu0 0.0
    %303 = vmatpush1.msra.mxu0 0.0
    %304 = vmatprep.subr.mxu0 0.0
    %305 = vmatpush1.msra.mxu0 0.0
    %306 = vmatprep.subr.mxu0 0.0
    %307 = vmatpush1.msra.mxu0 0.0
    %308 = vmatprep.subr.mxu0 0.0
    %309 = vmatpush1.msra.mxu0 0.0
    %310 = vmatprep.subr.mxu0 0.0
    %311 = vmatpush1.msra.mxu0 0.0
    %312 = vmatprep.subr.mxu0 0.0
    %313 = vmatpush1.msra.mxu0 0.0
    %314 = vmatprep.subr.mxu0 0.0
    %315 = vmatpush1.msra.mxu0 0.0
    %316 = vmatprep.subr.mxu0 0.0
    %317 = vmatpush1.msra.mxu0 0.0
    %318 = vmatprep.subr.mxu0 0.0
    %319 = vmatpush1.msra.mxu0 0.0
    %320 = vmatprep.subr.mxu0 0.0
    %321 = vmatpush1.msra.mxu0 0.0
    %322 = vmatprep.subr.mxu0 0.0
    %323 = vmatpush1.msra.mxu0 0.0
    %324 = vmatprep.subr.mxu0 0.0
    %325 = vmatpush1.msra.mxu0 0.0
    %326 = vmatprep.subr.mxu0 0.0
    %327 = vmatpush1.msra.mxu0 0.0
    %328 = vmatprep.subr.mxu0 0.0
    %329 = vmatpush1.msra.mxu0 0.0
    %330 = vmatprep.subr.mxu0 0.0
    %331 = vmatpush1.msra.mxu0 0.0
    %332 = vmatprep.subr.mxu0 0.0
    %333 = vmatpush1.msra.mxu0 0.0
    %334 = vmatprep.subr.mxu0 0.0
    %335 = vmatpush1.msra.mxu0 0.0
    %336 = vmatprep.subr.mxu0 0.0
    %337 = vmatpush1.msra.mxu0 0.0
    %338 = vmatprep.subr.mxu0 0.0
    %339 = vmatpush1.msra.mxu0 0.0
    %340 = vmatprep.subr.mxu0 0.0
    %341 = vmatpush1.msra.mxu0 0.0
    %342 = vmatprep.subr.mxu0 0.0
    %343 = vmatpush1.msra.mxu0 0.0
    %344 = vmatprep.subr.mxu0 0.0
    %345 = vmatpush1.msra.mxu0 0.0
    %346 = vmatprep.subr.mxu0 0.0
    %347 = vmatpush1.msra.mxu0 0.0
    %348 = vmatprep.mubr.f32.mxu0 0.0
    %v349 = vand.u32 %v59, 4294901760
    %v350 = vsub.f32 %v59, %v349
    %351 = vmatmul.mubr.f32.gmra.mrb[0].mxu0 %v350
    %v352 = vpop.f32.mrb[0].mxu0
    %v353 = vadd.f32 %v259, %v352
    %v354 = vpop.f32.mrb[0].mxu0
    %355 = vmatprep.mubr.f32.mxu0 0.0
    %v356 = vand.u32 %v62, 4294901760
    %v357 = vsub.f32 %v62, %v356
    %358 = vmatmul.mubr.f32.gmra.mrb[0].mxu0 %v357
    %v359 = vpop.f32.mrb[0].mxu0
    %v360 = vadd.f32 %v265, %v359
    %v361 = vpop.f32.mrb[0].mxu0
    %362 = vmatprep.mubr.f32.mxu0 0.0
    %v363 = vand.u32 %v65, 4294901760
    %v364 = vsub.f32 %v65, %v363
    %365 = vmatmul.mubr.f32.gmra.mrb[0].mxu0 %v364
    %v366 = vpop.f32.mrb[0].mxu0
    %v367 = vadd.f32 %v271, %v366
    %v368 = vpop.f32.mrb[0].mxu0
    %369 = vmatprep.mubr.f32.mxu0 0.0
    %v370 = vand.u32 %v68, 4294901760
    %v371 = vsub.f32 %v68, %v370
    %372 = vmatmul.mubr.f32.gmra.mrb[0].mxu0 %v371
    %v373 = vpop.f32.mrb[0].mxu0
    %v374 = vadd.f32 %v277, %v373
    %v375 = vpop.f32.mrb[0].mxu0
    %376 = vdwg.mxu0
    %377 = vmatprep.subr.mxu0 0.0
    %v378 = vand.u32 %v31, 4294901760
    %379 = vmatpush1.msra.mxu0 %v378
    %380 = vmatprep.subr.mxu0 0.0
    %v381 = vand.u32 %v72, 4294901760
    %382 = vmatpush1.msra.mxu0 %v381
    %383 = vmatprep.subr.mxu0 0.0
    %384 = vmatpush1.msra.mxu0 0.0
    %385 = vmatprep.subr.mxu0 0.0
    %386 = vmatpush1.msra.mxu0 0.0
    %387 = vmatprep.subr.mxu0 0.0
    %388 = vmatpush1.msra.mxu0 0.0
    %389 = vmatprep.subr.mxu0 0.0
    %390 = vmatpush1.msra.mxu0 0.0
    %391 = vmatprep.subr.mxu0 0.0
    %392 = vmatpush1.msra.mxu0 0.0
    %393 = vmatprep.subr.mxu0 0.0
    %394 = vmatpush1.msra.mxu0 0.0
    %395 = vmatprep.subr.mxu0 0.0
    %396 = vmatpush1.msra.mxu0 0.0
    %397 = vmatprep.subr.mxu0 0.0
    %398 = vmatpush1.msra.mxu0 0.0
    %399 = vmatprep.subr.mxu0 0.0
    %400 = vmatpush1.msra.mxu0 0.0
    %401 = vmatprep.subr.mxu0 0.0
    %402 = vmatpush1.msra.mxu0 0.0
    %403 = vmatprep.subr.mxu0 0.0
    %404 = vmatpush1.msra.mxu0 0.0
    %405 = vmatprep.subr.mxu0 0.0
    %406 = vmatpush1.msra.mxu0 0.0
    %407 = vmatprep.subr.mxu0 0.0
    %408 = vmatpush1.msra.mxu0 0.0
    %409 = vmatprep.subr.mxu0 0.0
    %410 = vmatpush1.msra.mxu0 0.0
    %411 = vmatprep.subr.mxu0 0.0
    %412 = vmatpush1.msra.mxu0 0.0
    %413 = vmatprep.subr.mxu0 0.0
    %414 = vmatpush1.msra.mxu0 0.0
    %415 = vmatprep.subr.mxu0 0.0
    %416 = vmatpush1.msra.mxu0 0.0
    %417 = vmatprep.subr.mxu0 0.0
    %418 = vmatpush1.msra.mxu0 0.0
    %419 = vmatprep.subr.mxu0 0.0
    %420 = vmatpush1.msra.mxu0 0.0
    %421 = vmatprep.subr.mxu0 0.0
    %422 = vmatpush1.msra.mxu0 0.0
    %423 = vmatprep.subr.mxu0 0.0
    %424 = vmatpush1.msra.mxu0 0.0
    %425 = vmatprep.subr.mxu0 0.0
    %426 = vmatpush1.msra.mxu0 0.0
    %427 = vmatprep.subr.mxu0 0.0
    %428 = vmatpush1.msra.mxu0 0.0
    %429 = vmatprep.subr.mxu0 0.0
    %430 = vmatpush1.msra.mxu0 0.0
    %431 = vmatprep.subr.mxu0 0.0
    %432 = vmatpush1.msra.mxu0 0.0
    %433 = vmatprep.subr.mxu0 0.0
    %434 = vmatpush1.msra.mxu0 0.0
    %435 = vmatprep.subr.mxu0 0.0
    %436 = vmatpush1.msra.mxu0 0.0
    %437 = vmatprep.subr.mxu0 0.0
    %438 = vmatpush1.msra.mxu0 0.0
    %439 = vmatprep.subr.mxu0 0.0
    %440 = vmatpush1.msra.mxu0 0.0
    %441 = vmatprep.subr.mxu0 0.0
    %442 = vmatpush1.msra.mxu0 0.0
    %443 = vmatprep.mubr.f32.mxu0 0.0
    %v444 = vand.u32 %v59, 4294901760
    %v445 = vsub.f32 %v59, %v444
    %v446 = vand.u32 %v445, 4294901760
    %447 = vmatmul.mubr.f32.gmra.mrb[0].mxu0 %v446
    %v448 = vpop.f32.mrb[0].mxu0
    %v449 = vadd.f32 %v353, %v448
    %v450 = vpop.f32.mrb[0].mxu0
    %451 = vmatprep.mubr.f32.mxu0 0.0
    %v452 = vand.u32 %v62, 4294901760
    %v453 = vsub.f32 %v62, %v452
    %v454 = vand.u32 %v453, 4294901760
    %455 = vmatmul.mubr.f32.gmra.mrb[0].mxu0 %v454
    %v456 = vpop.f32.mrb[0].mxu0
    %v457 = vadd.f32 %v360, %v456
    %v458 = vpop.f32.mrb[0].mxu0
    %459 = vmatprep.mubr.f32.mxu0 0.0
    %v460 = vand.u32 %v65, 4294901760
    %v461 = vsub.f32 %v65, %v460
    %v462 = vand.u32 %v461, 4294901760
    %463 = vmatmul.mubr.f32.gmra.mrb[0].mxu0 %v462
    %v464 = vpop.f32.mrb[0].mxu0
    %v465 = vadd.f32 %v367, %v464
    %v466 = vpop.f32.mrb[0].mxu0
    %467 = vmatprep.mubr.f32.mxu0 0.0
    %v468 = vand.u32 %v68, 4294901760
    %v469 = vsub.f32 %v68, %v468
    %v470 = vand.u32 %v469, 4294901760
    %471 = vmatmul.mubr.f32.gmra.mrb[0].mxu0 %v470
    %v472 = vpop.f32.mrb[0].mxu0
    %v473 = vadd.f32 %v374, %v472
    %v474 = vpop.f32.mrb[0].mxu0
    %475 = vdwg.mxu0
    %476 = vmatprep.subr.mxu0 0.0
    %v477 = vand.u32 %v31, 4294901760
    %v478 = vsub.f32 %v31, %v477
    %v479 = vand.u32 %v478, 4294901760
    %480 = vmatpush1.msra.mxu0 %v479
    %481 = vmatprep.subr.mxu0 0.0
    %v482 = vand.u32 %v72, 4294901760
    %v483 = vsub.f32 %v72, %v482
    %v484 = vand.u32 %v483, 4294901760
    %485 = vmatpush1.msra.mxu0 %v484
    %486 = vmatprep.subr.mxu0 0.0
    %487 = vmatpush1.msra.mxu0 0.0
    %488 = vmatprep.subr.mxu0 0.0
    %489 = vmatpush1.msra.mxu0 0.0
    %490 = vmatprep.subr.mxu0 0.0
    %491 = vmatpush1.msra.mxu0 0.0
    %492 = vmatprep.subr.mxu0 0.0
    %493 = vmatpush1.msra.mxu0 0.0
    %494 = vmatprep.subr.mxu0 0.0
    %495 = vmatpush1.msra.mxu0 0.0
    %496 = vmatprep.subr.mxu0 0.0
    %497 = vmatpush1.msra.mxu0 0.0
    %498 = vmatprep.subr.mxu0 0.0
    %499 = vmatpush1.msra.mxu0 0.0
    %500 = vmatprep.subr.mxu0 0.0
    %501 = vmatpush1.msra.mxu0 0.0
    %502 = vmatprep.subr.mxu0 0.0
    %503 = vmatpush1.msra.mxu0 0.0
    %504 = vmatprep.subr.mxu0 0.0
    %505 = vmatpush1.msra.mxu0 0.0
    %506 = vmatprep.subr.mxu0 0.0
    %507 = vmatpush1.msra.mxu0 0.0
    %508 = vmatprep.subr.mxu0 0.0
    %509 = vmatpush1.msra.mxu0 0.0
    %510 = vmatprep.subr.mxu0 0.0
    %511 = vmatpush1.msra.mxu0 0.0
    %512 = vmatprep.subr.mxu0 0.0
    %513 = vmatpush1.msra.mxu0 0.0
    %514 = vmatprep.subr.mxu0 0.0
    %515 = vmatpush1.msra.mxu0 0.0
    %516 = vmatprep.subr.mxu0 0.0
    %517 = vmatpush1.msra.mxu0 0.0
    %518 = vmatprep.subr.mxu0 0.0
    %519 = vmatpush1.msra.mxu0 0.0
    %520 = vmatprep.subr.mxu0 0.0
    %521 = vmatpush1.msra.mxu0 0.0
    %522 = vmatprep.subr.mxu0 0.0
    %523 = vmatpush1.msra.mxu0 0.0
    %524 = vmatprep.subr.mxu0 0.0
    %525 = vmatpush1.msra.mxu0 0.0
    %526 = vmatprep.subr.mxu0 0.0
    %527 = vmatpush1.msra.mxu0 0.0
    %528 = vmatprep.subr.mxu0 0.0
    %529 = vmatpush1.msra.mxu0 0.0
    %530 = vmatprep.subr.mxu0 0.0
    %531 = vmatpush1.msra.mxu0 0.0
    %532 = vmatprep.subr.mxu0 0.0
    %533 = vmatpush1.msra.mxu0 0.0
    %534 = vmatprep.subr.mxu0 0.0
    %535 = vmatpush1.msra.mxu0 0.0
    %536 = vmatprep.subr.mxu0 0.0
    %537 = vmatpush1.msra.mxu0 0.0
    %538 = vmatprep.subr.mxu0 0.0
    %539 = vmatpush1.msra.mxu0 0.0
    %540 = vmatprep.subr.mxu0 0.0
    %541 = vmatpush1.msra.mxu0 0.0
    %542 = vmatprep.subr.mxu0 0.0
    %543 = vmatpush1.msra.mxu0 0.0
    %544 = vmatprep.subr.mxu0 0.0
    %545 = vmatpush1.msra.mxu0 0.0
    %546 = vmatprep.mubr.f32.mxu0 0.0
    %v547 = vand.u32 %v59, 4294901760
    %548 = vmatmul.mubr.f32.gmra.mrb[0].mxu0 %v547
    %v549 = vpop.f32.mrb[0].mxu0
    %v550 = vadd.f32 %v449, %v549
    %v551 = vpop.f32.mrb[0].mxu0
    %552 = vmatprep.mubr.f32.mxu0 0.0
    %v553 = vand.u32 %v62, 4294901760
    %554 = vmatmul.mubr.f32.gmra.mrb[0].mxu0 %v553
    %v555 = vpop.f32.mrb[0].mxu0
    %v556 = vadd.f32 %v457, %v555
    %v557 = vpop.f32.mrb[0].mxu0
    %558 = vmatprep.mubr.f32.mxu0 0.0
    %v559 = vand.u32 %v65, 4294901760
    %560 = vmatmul.mubr.f32.gmra.mrb[0].mxu0 %v559
    %v561 = vpop.f32.mrb[0].mxu0
    %v562 = vadd.f32 %v465, %v561
    %v563 = vpop.f32.mrb[0].mxu0
    %564 = vmatprep.mubr.f32.mxu0 0.0
    %v565 = vand.u32 %v68, 4294901760
    %566 = vmatmul.mubr.f32.gmra.mrb[0].mxu0 %v565
    %v567 = vpop.f32.mrb[0].mxu0
    %v568 = vadd.f32 %v473, %v567
    %v569 = vpop.f32.mrb[0].mxu0
    %570 = vdwg.mxu0
    %571 = vmatprep.subr.mxu0 0.0
    %v572 = vand.u32 %v31, 4294901760
    %573 = vmatpush1.msra.mxu0 %v572
    %574 = vmatprep.subr.mxu0 0.0
    %v575 = vand.u32 %v72, 4294901760
    %576 = vmatpush1.msra.mxu0 %v575
    %577 = vmatprep.subr.mxu0 0.0
    %578 = vmatpush1.msra.mxu0 0.0
    %579 = vmatprep.subr.mxu0 0.0
    %580 = vmatpush1.msra.mxu0 0.0
    %581 = vmatprep.subr.mxu0 0.0
    %582 = vmatpush1.msra.mxu0 0.0
    %583 = vmatprep.subr.mxu0 0.0
    %584 = vmatpush1.msra.mxu0 0.0
    %585 = vmatprep.subr.mxu0 0.0
    %586 = vmatpush1.msra.mxu0 0.0
    %587 = vmatprep.subr.mxu0 0.0
    %588 = vmatpush1.msra.mxu0 0.0
    %589 = vmatprep.subr.mxu0 0.0
    %590 = vmatpush1.msra.mxu0 0.0
    %591 = vmatprep.subr.mxu0 0.0
    %592 = vmatpush1.msra.mxu0 0.0
    %593 = vmatprep.subr.mxu0 0.0
    %594 = vmatpush1.msra.mxu0 0.0
    %595 = vmatprep.subr.mxu0 0.0
    %596 = vmatpush1.msra.mxu0 0.0
    %597 = vmatprep.subr.mxu0 0.0
    %598 = vmatpush1.msra.mxu0 0.0
    %599 = vmatprep.subr.mxu0 0.0
    %600 = vmatpush1.msra.mxu0 0.0
    %601 = vmatprep.subr.mxu0 0.0
    %602 = vmatpush1.msra.mxu0 0.0
    %603 = vmatprep.subr.mxu0 0.0
    %604 = vmatpush1.msra.mxu0 0.0
    %605 = vmatprep.subr.mxu0 0.0
    %606 = vmatpush1.msra.mxu0 0.0
    %607 = vmatprep.subr.mxu0 0.0
    %608 = vmatpush1.msra.mxu0 0.0
    %609 = vmatprep.subr.mxu0 0.0
    %610 = vmatpush1.msra.mxu0 0.0
    %611 = vmatprep.subr.mxu0 0.0
    %612 = vmatpush1.msra.mxu0 0.0
    %613 = vmatprep.subr.mxu0 0.0
    %614 = vmatpush1.msra.mxu0 0.0
    %615 = vmatprep.subr.mxu0 0.0
    %616 = vmatpush1.msra.mxu0 0.0
    %617 = vmatprep.subr.mxu0 0.0
    %618 = vmatpush1.msra.mxu0 0.0
    %619 = vmatprep.subr.mxu0 0.0
    %620 = vmatpush1.msra.mxu0 0.0
    %621 = vmatprep.subr.mxu0 0.0
    %622 = vmatpush1.msra.mxu0 0.0
    %623 = vmatprep.subr.mxu0 0.0
    %624 = vmatpush1.msra.mxu0 0.0
    %625 = vmatprep.subr.mxu0 0.0
    %626 = vmatpush1.msra.mxu0 0.0
    %627 = vmatprep.subr.mxu0 0.0
    %628 = vmatpush1.msra.mxu0 0.0
    %629 = vmatprep.subr.mxu0 0.0
    %630 = vmatpush1.msra.mxu0 0.0
    %631 = vmatprep.subr.mxu0 0.0
    %632 = vmatpush1.msra.mxu0 0.0
    %633 = vmatprep.subr.mxu0 0.0
    %634 = vmatpush1.msra.mxu0 0.0
    %635 = vmatprep.subr.mxu0 0.0
    %636 = vmatpush1.msra.mxu0 0.0
    %637 = vmatprep.mubr.f32.mxu0 0.0
    %v638 = vand.u32 %v59, 4294901760
    %639 = vmatmul.mubr.f32.gmra.mrb[0].mxu0 %v638
    %v640 = vpop.f32.mrb[0].mxu0
    %v641 = vadd.f32 %v550, %v640
    %v642 = vpop.f32.mrb[0].mxu0
    %643 = vmatprep.mubr.f32.mxu0 0.0
    %v644 = vand.u32 %v62, 4294901760
    %645 = vmatmul.mubr.f32.gmra.mrb[0].mxu0 %v644
    %v646 = vpop.f32.mrb[0].mxu0
    %v647 = vadd.f32 %v556, %v646
    %v648 = vpop.f32.mrb[0].mxu0
    %649 = vmatprep.mubr.f32.mxu0 0.0
    %v650 = vand.u32 %v65, 4294901760
    %651 = vmatmul.mubr.f32.gmra.mrb[0].mxu0 %v650
    %v652 = vpop.f32.mrb[0].mxu0
    %v653 = vadd.f32 %v562, %v652
    %v654 = vpop.f32.mrb[0].mxu0
    %655 = vmatprep.mubr.f32.mxu0 0.0
    %v656 = vand.u32 %v68, 4294901760
    %657 = vmatmul.mubr.f32.gmra.mrb[0].mxu0 %v656
    %v658 = vpop.f32.mrb[0].mxu0
    %v659 = vadd.f32 %v568, %v658
    %v660 = vpop.f32.mrb[0].mxu0
    %661 = vdwg.mxu0
    %v662 = vmax.f32 %v641, 0.0
    %v663 = vmax.f32 %v647, 0.0
    %v664 = vmax.f32 %v653, 0.0
    %v665 = vmax.f32 %v659, 0.0
    %v666 = vld [vmem:[%s3] sm:$0xff]
    %v667 = vld [vmem:[%s3 + $0x8] sm:$0xff]
    %v668 = vld [vmem:[%s3 + $0x10] sm:$0xff]
    %v669 = vld [vmem:[%s3 + $0x18] sm:$0xff]
    %v670 = vld [vmem:[%s4] sm:$0xff]
    %v671 = vld [vmem:[%s4 + $0x8] sm:$0xff]
    %v672 = vld [vmem:[%s4 + $0x10] sm:$0xff]
    %v673 = vld [vmem:[%s4 + $0x18] sm:$0xff]
    %675 = vset.pattern.permute.xlu0 0
    %676 = vperm.xlu0 %675, %v670
    %v677 = vpop.permute.xlu0 %676
    %680 = vset.pattern.permute.xlu0 0
    %681 = vperm.xlu0 %680, %v671
    %v682 = vpop.permute.xlu0 %681
    %685 = vset.pattern.permute.xlu0 0
    %686 = vperm.xlu0 %685, %v672
    %v687 = vpop.permute.xlu0 %686
    %690 = vset.pattern.permute.xlu0 0
    %691 = vperm.xlu0 %690, %v673
    %v692 = vpop.permute.xlu0 %691
    %vm694 = vcmask 261120
    %v696 = vsel %vm694, %v666, 0
    %v699 = vsel %vm694, %v667, 0
    %v702 = vsel %vm694, %v668, 0
    %v705 = vsel %vm694, %v669, 0
    %707 = vmatprep.subr.mxu0 0.0
    %v708 = vand.u32 %v662, 4294901760
    %709 = vmatpush1.msra.mxu0 %v708
    %710 = vmatprep.subr.mxu0 0.0
    %v711 = vand.u32 %v663, 4294901760
    %712 = vmatpush1.msra.mxu0 %v711
    %713 = vmatprep.subr.mxu0 0.0
    %v714 = vand.u32 %v664, 4294901760
    %715 = vmatpush1.msra.mxu0 %v714
    %716 = vmatprep.subr.mxu0 0.0
    %v717 = vand.u32 %v665, 4294901760
    %718 = vmatpush1.msra.mxu0 %v717
    %719 = vmatprep.subr.mxu0 0.0
    %720 = vmatpush1.msra.mxu0 0.0
    %721 = vmatprep.subr.mxu0 0.0
    %722 = vmatpush1.msra.mxu0 0.0
    %723 = vmatprep.subr.mxu0 0.0
    %724 = vmatpush1.msra.mxu0 0.0
    %725 = vmatprep.subr.mxu0 0.0
    %726 = vmatpush1.msra.mxu0 0.0
    %727 = vmatprep.subr.mxu0 0.0
    %728 = vmatpush1.msra.mxu0 0.0
    %729 = vmatprep.subr.mxu0 0.0
    %730 = vmatpush1.msra.mxu0 0.0
    %731 = vmatprep.subr.mxu0 0.0
    %732 = vmatpush1.msra.mxu0 0.0
    %733 = vmatprep.subr.mxu0 0.0
    %734 = vmatpush1.msra.mxu0 0.0
    %735 = vmatprep.subr.mxu0 0.0
    %736 = vmatpush1.msra.mxu0 0.0
    %737 = vmatprep.subr.mxu0 0.0
    %738 = vmatpush1.msra.mxu0 0.0
    %739 = vmatprep.subr.mxu0 0.0
    %740 = vmatpush1.msra.mxu0 0.0
    %741 = vmatprep.subr.mxu0 0.0
    %742 = vmatpush1.msra.mxu0 0.0
    %743 = vmatprep.subr.mxu0 0.0
    %744 = vmatpush1.msra.mxu0 0.0
    %745 = vmatprep.subr.mxu0 0.0
    %746 = vmatpush1.msra.mxu0 0.0
    %747 = vmatprep.subr.mxu0 0.0
    %748 = vmatpush1.msra.mxu0 0.0
    %749 = vmatprep.subr.mxu0 0.0
    %750 = vmatpush1.msra.mxu0 0.0
    %751 = vmatprep.subr.mxu0 0.0
    %752 = vmatpush1.msra.mxu0 0.0
    %753 = vmatprep.subr.mxu0 0.0
    %754 = vmatpush1.msra.mxu0 0.0
    %755 = vmatprep.subr.mxu0 0.0
    %756 = vmatpush1.msra.mxu0 0.0
    %757 = vmatprep.subr.mxu0 0.0
    %758 = vmatpush1.msra.mxu0 0.0
    %759 = vmatprep.subr.mxu0 0.0
    %760 = vmatpush1.msra.mxu0 0.0
    %761 = vmatprep.subr.mxu0 0.0
    %762 = vmatpush1.msra.mxu0 0.0
    %763 = vmatprep.subr.mxu0 0.0
    %764 = vmatpush1.msra.mxu0 0.0
    %765 = vmatprep.subr.mxu0 0.0
    %766 = vmatpush1.msra.mxu0 0.0
    %767 = vmatprep.subr.mxu0 0.0
    %768 = vmatpush1.msra.mxu0 0.0
    %769 = vmatprep.subr.mxu0 0.0
    %770 = vmatpush1.msra.mxu0 0.0
    %771 = vmatprep.subr.mxu0 0.0
    %772 = vmatpush1.msra.mxu0 0.0
    %773 = vmatprep.subr.mxu0 0.0
    %774 = vmatpush1.msra.mxu0 0.0
    %775 = vmatprep.mubr.f32.mxu0 0.0
    %v776 = vand.u32 %v696, 4294901760
    %v777 = vsub.f32 %v696, %v776
    %v778 = vand.u32 %v777, 4294901760
    %v779 = vsub.f32 %v777, %v778
    %v780 = vand.u32 %v779, 4294901760
    %781 = vmatmul.mubr.f32.gmra.mrb[0].mxu0 %v780
    %v782 = vpop.f32.mrb[0].mxu0
    %v783 = vadd.f32 %v677, %v782
    %v784 = vpop.f32.mrb[0].mxu0
    %785 = vmatprep.mubr.f32.mxu0 0.0
    %v786 = vand.u32 %v699, 4294901760
    %v787 = vsub.f32 %v699, %v786
    %v788 = vand.u32 %v787, 4294901760
    %v789 = vsub.f32 %v787, %v788
    %v790 = vand.u32 %v789, 4294901760
    %791 = vmatmul.mubr.f32.gmra.mrb[0].mxu0 %v790
    %v792 = vpop.f32.mrb[0].mxu0
    %v793 = vadd.f32 %v682, %v792
    %v794 = vpop.f32.mrb[0].mxu0
    %795 = vmatprep.mubr.f32.mxu0 0.0
    %v796 = vand.u32 %v702, 4294901760
    %v797 = vsub.f32 %v702, %v796
    %v798 = vand.u32 %v797, 4294901760
    %v799 = vsub.f32 %v797, %v798
    %v800 = vand.u32 %v799, 4294901760
    %801 = vmatmul.mubr.f32.gmra.mrb[0].mxu0 %v800
    %v802 = vpop.f32.mrb[0].mxu0
    %v803 = vadd.f32 %v687, %v802
    %v804 = vpop.f32.mrb[0].mxu0
    %805 = vmatprep.mubr.f32.mxu0 0.0
    %v806 = vand.u32 %v705, 4294901760
    %v807 = vsub.f32 %v705, %v806
    %v808 = vand.u32 %v807, 4294901760
    %v809 = vsub.f32 %v807, %v808
    %v810 = vand.u32 %v809, 4294901760
    %811 = vmatmul.mubr.f32.gmra.mrb[0].mxu0 %v810
    %v812 = vpop.f32.mrb[0].mxu0
    %v813 = vadd.f32 %v692, %v812
    %v814 = vpop.f32.mrb[0].mxu0
    %815 = vdwg.mxu0
    %816 = vmatprep.subr.mxu0 0.0
    %v817 = vand.u32 %v662, 4294901760
    %v818 = vsub.f32 %v662, %v817
    %v819 = vand.u32 %v818, 4294901760
    %v820 = vsub.f32 %v818, %v819
    %v821 = vand.u32 %v820, 4294901760
    %822 = vmatpush1.msra.mxu0 %v821
    %823 = vmatprep.subr.mxu0 0.0
    %v824 = vand.u32 %v663, 4294901760
    %v825 = vsub.f32 %v663, %v824
    %v826 = vand.u32 %v825, 4294901760
    %v827 = vsub.f32 %v825, %v826
    %v828 = vand.u32 %v827, 4294901760
    %829 = vmatpush1.msra.mxu0 %v828
    %830 = vmatprep.subr.mxu0 0.0
    %v831 = vand.u32 %v664, 4294901760
    %v832 = vsub.f32 %v664, %v831
    %v833 = vand.u32 %v832, 4294901760
    %v834 = vsub.f32 %v832, %v833
    %v835 = vand.u32 %v834, 4294901760
    %836 = vmatpush1.msra.mxu0 %v835
    %837 = vmatprep.subr.mxu0 0.0
    %v838 = vand.u32 %v665, 4294901760
    %v839 = vsub.f32 %v665, %v838
    %v840 = vand.u32 %v839, 4294901760
    %v841 = vsub.f32 %v839, %v840
    %v842 = vand.u32 %v841, 4294901760
    %843 = vmatpush1.msra.mxu0 %v842
    %844 = vmatprep.subr.mxu0 0.0
    %845 = vmatpush1.msra.mxu0 0.0
    %846 = vmatprep.subr.mxu0 0.0
    %847 = vmatpush1.msra.mxu0 0.0
    %848 = vmatprep.subr.mxu0 0.0
    %849 = vmatpush1.msra.mxu0 0.0
    %850 = vmatprep.subr.mxu0 0.0
    %851 = vmatpush1.msra.mxu0 0.0
    %852 = vmatprep.subr.mxu0 0.0
    %853 = vmatpush1.msra.mxu0 0.0
    %854 = vmatprep.subr.mxu0 0.0
    %855 = vmatpush1.msra.mxu0 0.0
    %856 = vmatprep.subr.mxu0 0.0
    %857 = vmatpush1.msra.mxu0 0.0
    %858 = vmatprep.subr.mxu0 0.0
    %859 = vmatpush1.msra.mxu0 0.0
    %860 = vmatprep.subr.mxu0 0.0
    %861 = vmatpush1.msra.mxu0 0.0
    %862 = vmatprep.subr.mxu0 0.0
    %863 = vmatpush1.msra.mxu0 0.0
    %864 = vmatprep.subr.mxu0 0.0
    %865 = vmatpush1.msra.mxu0 0.0
    %866 = vmatprep.subr.mxu0 0.0
    %867 = vmatpush1.msra.mxu0 0.0
    %868 = vmatprep.subr.mxu0 0.0
    %869 = vmatpush1.msra.mxu0 0.0
    %870 = vmatprep.subr.mxu0 0.0
    %871 = vmatpush1.msra.mxu0 0.0
    %872 = vmatprep.subr.mxu0 0.0
    %873 = vmatpush1.msra.mxu0 0.0
    %874 = vmatprep.subr.mxu0 0.0
    %875 = vmatpush1.msra.mxu0 0.0
    %876 = vmatprep.subr.mxu0 0.0
    %877 = vmatpush1.msra.mxu0 0.0
    %878 = vmatprep.subr.mxu0 0.0
    %879 = vmatpush1.msra.mxu0 0.0
    %880 = vmatprep.subr.mxu0 0.0
    %881 = vmatpush1.msra.mxu0 0.0
    %882 = vmatprep.subr.mxu0 0.0
    %883 = vmatpush1.msra.mxu0 0.0
    %884 = vmatprep.subr.mxu0 0.0
    %885 = vmatpush1.msra.mxu0 0.0
    %886 = vmatprep.subr.mxu0 0.0
    %887 = vmatpush1.msra.mxu0 0.0
    %888 = vmatprep.subr.mxu0 0.0
    %889 = vmatpush1.msra.mxu0 0.0
    %890 = vmatprep.subr.mxu0 0.0
    %891 = vmatpush1.msra.mxu0 0.0
    %892 = vmatprep.subr.mxu0 0.0
    %893 = vmatpush1.msra.mxu0 0.0
    %894 = vmatprep.subr.mxu0 0.0
    %895 = vmatpush1.msra.mxu0 0.0
    %896 = vmatprep.subr.mxu0 0.0
    %897 = vmatpush1.msra.mxu0 0.0
    %898 = vmatprep.subr.mxu0 0.0
    %899 = vmatpush1.msra.mxu0 0.0
    %900 = vmatprep.mubr.f32.mxu0 0.0
    %v901 = vand.u32 %v696, 4294901760
    %902 = vmatmul.mubr.f32.gmra.mrb[0].mxu0 %v901
    %v903 = vpop.f32.mrb[0].mxu0
    %v904 = vadd.f32 %v783, %v903
    %v905 = vpop.f32.mrb[0].mxu0
    %906 = vmatprep.mubr.f32.mxu0 0.0
    %v907 = vand.u32 %v699, 4294901760
    %908 = vmatmul.mubr.f32.gmra.mrb[0].mxu0 %v907
    %v909 = vpop.f32.mrb[0].mxu0
    %v910 = vadd.f32 %v793, %v909
    %v911 = vpop.f32.mrb[0].mxu0
    %912 = vmatprep.mubr.f32.mxu0 0.0
    %v913 = vand.u32 %v702, 4294901760
    %914 = vmatmul.mubr.f32.gmra.mrb[0].mxu0 %v913
    %v915 = vpop.f32.mrb[0].mxu0
    %v916 = vadd.f32 %v803, %v915
    %v917 = vpop.f32.mrb[0].mxu0
    %918 = vmatprep.mubr.f32.mxu0 0.0
    %v919 = vand.u32 %v705, 4294901760
    %920 = vmatmul.mubr.f32.gmra.mrb[0].mxu0 %v919
    %v921 = vpop.f32.mrb[0].mxu0
    %v922 = vadd.f32 %v813, %v921
    %v923 = vpop.f32.mrb[0].mxu0
    %924 = vdwg.mxu0
    %925 = vmatprep.subr.mxu0 0.0
    %v926 = vand.u32 %v662, 4294901760
    %v927 = vsub.f32 %v662, %v926
    %928 = vmatpush1.msra.mxu0 %v927
    %929 = vmatprep.subr.mxu0 0.0
    %v930 = vand.u32 %v663, 4294901760
    %v931 = vsub.f32 %v663, %v930
    %932 = vmatpush1.msra.mxu0 %v931
    %933 = vmatprep.subr.mxu0 0.0
    %v934 = vand.u32 %v664, 4294901760
    %v935 = vsub.f32 %v664, %v934
    %936 = vmatpush1.msra.mxu0 %v935
    %937 = vmatprep.subr.mxu0 0.0
    %v938 = vand.u32 %v665, 4294901760
    %v939 = vsub.f32 %v665, %v938
    %940 = vmatpush1.msra.mxu0 %v939
    %941 = vmatprep.subr.mxu0 0.0
    %942 = vmatpush1.msra.mxu0 0.0
    %943 = vmatprep.subr.mxu0 0.0
    %944 = vmatpush1.msra.mxu0 0.0
    %945 = vmatprep.subr.mxu0 0.0
    %946 = vmatpush1.msra.mxu0 0.0
    %947 = vmatprep.subr.mxu0 0.0
    %948 = vmatpush1.msra.mxu0 0.0
    %949 = vmatprep.subr.mxu0 0.0
    %950 = vmatpush1.msra.mxu0 0.0
    %951 = vmatprep.subr.mxu0 0.0
    %952 = vmatpush1.msra.mxu0 0.0
    %953 = vmatprep.subr.mxu0 0.0
    %954 = vmatpush1.msra.mxu0 0.0
    %955 = vmatprep.subr.mxu0 0.0
    %956 = vmatpush1.msra.mxu0 0.0
    %957 = vmatprep.subr.mxu0 0.0
    %958 = vmatpush1.msra.mxu0 0.0
    %959 = vmatprep.subr.mxu0 0.0
    %960 = vmatpush1.msra.mxu0 0.0
    %961 = vmatprep.subr.mxu0 0.0
    %962 = vmatpush1.msra.mxu0 0.0
    %963 = vmatprep.subr.mxu0 0.0
    %964 = vmatpush1.msra.mxu0 0.0
    %965 = vmatprep.subr.mxu0 0.0
    %966 = vmatpush1.msra.mxu0 0.0
    %967 = vmatprep.subr.mxu0 0.0
    %968 = vmatpush1.msra.mxu0 0.0
    %969 = vmatprep.subr.mxu0 0.0
    %970 = vmatpush1.msra.mxu0 0.0
    %971 = vmatprep.subr.mxu0 0.0
    %972 = vmatpush1.msra.mxu0 0.0
    %973 = vmatprep.subr.mxu0 0.0
    %974 = vmatpush1.msra.mxu0 0.0
    %975 = vmatprep.subr.mxu0 0.0
    %976 = vmatpush1.msra.mxu0 0.0
    %977 = vmatprep.subr.mxu0 0.0
    %978 = vmatpush1.msra.mxu0 0.0
    %979 = vmatprep.subr.mxu0 0.0
    %980 = vmatpush1.msra.mxu0 0.0
    %981 = vmatprep.subr.mxu0 0.0
    %982 = vmatpush1.msra.mxu0 0.0
    %983 = vmatprep.subr.mxu0 0.0
    %984 = vmatpush1.msra.mxu0 0.0
    %985 = vmatprep.subr.mxu0 0.0
    %986 = vmatpush1.msra.mxu0 0.0
    %987 = vmatprep.subr.mxu0 0.0
    %988 = vmatpush1.msra.mxu0 0.0
    %989 = vmatprep.subr.mxu0 0.0
    %990 = vmatpush1.msra.mxu0 0.0
    %991 = vmatprep.subr.mxu0 0.0
    %992 = vmatpush1.msra.mxu0 0.0
    %993 = vmatprep.subr.mxu0 0.0
    %994 = vmatpush1.msra.mxu0 0.0
    %995 = vmatprep.subr.mxu0 0.0
    %996 = vmatpush1.msra.mxu0 0.0
    %997 = vmatprep.mubr.f32.mxu0 0.0
    %v998 = vand.u32 %v696, 4294901760
    %v999 = vsub.f32 %v696, %v998
    %1000 = vmatmul.mubr.f32.gmra.mrb[0].mxu0 %v999
    %v1001 = vpop.f32.mrb[0].mxu0
    %v1002 = vadd.f32 %v904, %v1001
    %v1003 = vpop.f32.mrb[0].mxu0
    %1004 = vmatprep.mubr.f32.mxu0 0.0
    %v1005 = vand.u32 %v699, 4294901760
    %v1006 = vsub.f32 %v699, %v1005
    %1007 = vmatmul.mubr.f32.gmra.mrb[0].mxu0 %v1006
    %v1008 = vpop.f32.mrb[0].mxu0
    %v1009 = vadd.f32 %v910, %v1008
    %v1010 = vpop.f32.mrb[0].mxu0
    %1011 = vmatprep.mubr.f32.mxu0 0.0
    %v1012 = vand.u32 %v702, 4294901760
    %v1013 = vsub.f32 %v702, %v1012
    %1014 = vmatmul.mubr.f32.gmra.mrb[0].mxu0 %v1013
    %v1015 = vpop.f32.mrb[0].mxu0
    %v1016 = vadd.f32 %v916, %v1015
    %v1017 = vpop.f32.mrb[0].mxu0
    %1018 = vmatprep.mubr.f32.mxu0 0.0
    %v1019 = vand.u32 %v705, 4294901760
    %v1020 = vsub.f32 %v705, %v1019
    %1021 = vmatmul.mubr.f32.gmra.mrb[0].mxu0 %v1020
    %v1022 = vpop.f32.mrb[0].mxu0
    %v1023 = vadd.f32 %v922, %v1022
    %v1024 = vpop.f32.mrb[0].mxu0
    %1025 = vdwg.mxu0
    %1026 = vmatprep.subr.mxu0 0.0
    %v1027 = vand.u32 %v662, 4294901760
    %1028 = vmatpush1.msra.mxu0 %v1027
    %1029 = vmatprep.subr.mxu0 0.0
    %v1030 = vand.u32 %v663, 4294901760
    %1031 = vmatpush1.msra.mxu0 %v1030
    %1032 = vmatprep.subr.mxu0 0.0
    %v1033 = vand.u32 %v664, 4294901760
    %1034 = vmatpush1.msra.mxu0 %v1033
    %1035 = vmatprep.subr.mxu0 0.0
    %v1036 = vand.u32 %v665, 4294901760
    %1037 = vmatpush1.msra.mxu0 %v1036
    %1038 = vmatprep.subr.mxu0 0.0
    %1039 = vmatpush1.msra.mxu0 0.0
    %1040 = vmatprep.subr.mxu0 0.0
    %1041 = vmatpush1.msra.mxu0 0.0
    %1042 = vmatprep.subr.mxu0 0.0
    %1043 = vmatpush1.msra.mxu0 0.0
    %1044 = vmatprep.subr.mxu0 0.0
    %1045 = vmatpush1.msra.mxu0 0.0
    %1046 = vmatprep.subr.mxu0 0.0
    %1047 = vmatpush1.msra.mxu0 0.0
    %1048 = vmatprep.subr.mxu0 0.0
    %1049 = vmatpush1.msra.mxu0 0.0
    %1050 = vmatprep.subr.mxu0 0.0
    %1051 = vmatpush1.msra.mxu0 0.0
    %1052 = vmatprep.subr.mxu0 0.0
    %1053 = vmatpush1.msra.mxu0 0.0
    %1054 = vmatprep.subr.mxu0 0.0
    %1055 = vmatpush1.msra.mxu0 0.0
    %1056 = vmatprep.subr.mxu0 0.0
    %1057 = vmatpush1.msra.mxu0 0.0
    %1058 = vmatprep.subr.mxu0 0.0
    %1059 = vmatpush1.msra.mxu0 0.0
    %1060 = vmatprep.subr.mxu0 0.0
    %1061 = vmatpush1.msra.mxu0 0.0
    %1062 = vmatprep.subr.mxu0 0.0
    %1063 = vmatpush1.msra.mxu0 0.0
    %1064 = vmatprep.subr.mxu0 0.0
    %1065 = vmatpush1.msra.mxu0 0.0
    %1066 = vmatprep.subr.mxu0 0.0
    %1067 = vmatpush1.msra.mxu0 0.0
    %1068 = vmatprep.subr.mxu0 0.0
    %1069 = vmatpush1.msra.mxu0 0.0
    %1070 = vmatprep.subr.mxu0 0.0
    %1071 = vmatpush1.msra.mxu0 0.0
    %1072 = vmatprep.subr.mxu0 0.0
    %1073 = vmatpush1.msra.mxu0 0.0
    %1074 = vmatprep.subr.mxu0 0.0
    %1075 = vmatpush1.msra.mxu0 0.0
    %1076 = vmatprep.subr.mxu0 0.0
    %1077 = vmatpush1.msra.mxu0 0.0
    %1078 = vmatprep.subr.mxu0 0.0
    %1079 = vmatpush1.msra.mxu0 0.0
    %1080 = vmatprep.subr.mxu0 0.0
    %1081 = vmatpush1.msra.mxu0 0.0
    %1082 = vmatprep.subr.mxu0 0.0
    %1083 = vmatpush1.msra.mxu0 0.0
    %1084 = vmatprep.subr.mxu0 0.0
    %1085 = vmatpush1.msra.mxu0 0.0
    %1086 = vmatprep.subr.mxu0 0.0
    %1087 = vmatpush1.msra.mxu0 0.0
    %1088 = vmatprep.subr.mxu0 0.0
    %1089 = vmatpush1.msra.mxu0 0.0
    %1090 = vmatprep.subr.mxu0 0.0
    %1091 = vmatpush1.msra.mxu0 0.0
    %1092 = vmatprep.subr.mxu0 0.0
    %1093 = vmatpush1.msra.mxu0 0.0
    %1094 = vmatprep.mubr.f32.mxu0 0.0
    %v1095 = vand.u32 %v696, 4294901760
    %v1096 = vsub.f32 %v696, %v1095
    %v1097 = vand.u32 %v1096, 4294901760
    %1098 = vmatmul.mubr.f32.gmra.mrb[0].mxu0 %v1097
    %v1099 = vpop.f32.mrb[0].mxu0
    %v1100 = vadd.f32 %v1002, %v1099
    %v1101 = vpop.f32.mrb[0].mxu0
    %1102 = vmatprep.mubr.f32.mxu0 0.0
    %v1103 = vand.u32 %v699, 4294901760
    %v1104 = vsub.f32 %v699, %v1103
    %v1105 = vand.u32 %v1104, 4294901760
    %1106 = vmatmul.mubr.f32.gmra.mrb[0].mxu0 %v1105
    %v1107 = vpop.f32.mrb[0].mxu0
    %v1108 = vadd.f32 %v1009, %v1107
    %v1109 = vpop.f32.mrb[0].mxu0
    %1110 = vmatprep.mubr.f32.mxu0 0.0
    %v1111 = vand.u32 %v702, 4294901760
    %v1112 = vsub.f32 %v702, %v1111
    %v1113 = vand.u32 %v1112, 4294901760
    %1114 = vmatmul.mubr.f32.gmra.mrb[0].mxu0 %v1113
    %v1115 = vpop.f32.mrb[0].mxu0
    %v1116 = vadd.f32 %v1016, %v1115
    %v1117 = vpop.f32.mrb[0].mxu0
    %1118 = vmatprep.mubr.f32.mxu0 0.0
    %v1119 = vand.u32 %v705, 4294901760
    %v1120 = vsub.f32 %v705, %v1119
    %v1121 = vand.u32 %v1120, 4294901760
    %1122 = vmatmul.mubr.f32.gmra.mrb[0].mxu0 %v1121
    %v1123 = vpop.f32.mrb[0].mxu0
    %v1124 = vadd.f32 %v1023, %v1123
    %v1125 = vpop.f32.mrb[0].mxu0
    %1126 = vdwg.mxu0
    %1127 = vmatprep.subr.mxu0 0.0
    %v1128 = vand.u32 %v662, 4294901760
    %v1129 = vsub.f32 %v662, %v1128
    %v1130 = vand.u32 %v1129, 4294901760
    %1131 = vmatpush1.msra.mxu0 %v1130
    %1132 = vmatprep.subr.mxu0 0.0
    %v1133 = vand.u32 %v663, 4294901760
    %v1134 = vsub.f32 %v663, %v1133
    %v1135 = vand.u32 %v1134, 4294901760
    %1136 = vmatpush1.msra.mxu0 %v1135
    %1137 = vmatprep.subr.mxu0 0.0
    %v1138 = vand.u32 %v664, 4294901760
    %v1139 = vsub.f32 %v664, %v1138
    %v1140 = vand.u32 %v1139, 4294901760
    %1141 = vmatpush1.msra.mxu0 %v1140
    %1142 = vmatprep.subr.mxu0 0.0
    %v1143 = vand.u32 %v665, 4294901760
    %v1144 = vsub.f32 %v665, %v1143
    %v1145 = vand.u32 %v1144, 4294901760
    %1146 = vmatpush1.msra.mxu0 %v1145
    %1147 = vmatprep.subr.mxu0 0.0
    %1148 = vmatpush1.msra.mxu0 0.0
    %1149 = vmatprep.subr.mxu0 0.0
    %1150 = vmatpush1.msra.mxu0 0.0
    %1151 = vmatprep.subr.mxu0 0.0
    %1152 = vmatpush1.msra.mxu0 0.0
    %1153 = vmatprep.subr.mxu0 0.0
    %1154 = vmatpush1.msra.mxu0 0.0
    %1155 = vmatprep.subr.mxu0 0.0
    %1156 = vmatpush1.msra.mxu0 0.0
    %1157 = vmatprep.subr.mxu0 0.0
    %1158 = vmatpush1.msra.mxu0 0.0
    %1159 = vmatprep.subr.mxu0 0.0
    %1160 = vmatpush1.msra.mxu0 0.0
    %1161 = vmatprep.subr.mxu0 0.0
    %1162 = vmatpush1.msra.mxu0 0.0
    %1163 = vmatprep.subr.mxu0 0.0
    %1164 = vmatpush1.msra.mxu0 0.0
    %1165 = vmatprep.subr.mxu0 0.0
    %1166 = vmatpush1.msra.mxu0 0.0
    %1167 = vmatprep.subr.mxu0 0.0
    %1168 = vmatpush1.msra.mxu0 0.0
    %1169 = vmatprep.subr.mxu0 0.0
    %1170 = vmatpush1.msra.mxu0 0.0
    %1171 = vmatprep.subr.mxu0 0.0
    %1172 = vmatpush1.msra.mxu0 0.0
    %1173 = vmatprep.subr.mxu0 0.0
    %1174 = vmatpush1.msra.mxu0 0.0
    %1175 = vmatprep.subr.mxu0 0.0
    %1176 = vmatpush1.msra.mxu0 0.0
    %1177 = vmatprep.subr.mxu0 0.0
    %1178 = vmatpush1.msra.mxu0 0.0
    %1179 = vmatprep.subr.mxu0 0.0
    %1180 = vmatpush1.msra.mxu0 0.0
    %1181 = vmatprep.subr.mxu0 0.0
    %1182 = vmatpush1.msra.mxu0 0.0
    %1183 = vmatprep.subr.mxu0 0.0
    %1184 = vmatpush1.msra.mxu0 0.0
    %1185 = vmatprep.subr.mxu0 0.0
    %1186 = vmatpush1.msra.mxu0 0.0
    %1187 = vmatprep.subr.mxu0 0.0
    %1188 = vmatpush1.msra.mxu0 0.0
    %1189 = vmatprep.subr.mxu0 0.0
    %1190 = vmatpush1.msra.mxu0 0.0
    %1191 = vmatprep.subr.mxu0 0.0
    %1192 = vmatpush1.msra.mxu0 0.0
    %1193 = vmatprep.subr.mxu0 0.0
    %1194 = vmatpush1.msra.mxu0 0.0
    %1195 = vmatprep.subr.mxu0 0.0
    %1196 = vmatpush1.msra.mxu0 0.0
    %1197 = vmatprep.subr.mxu0 0.0
    %1198 = vmatpush1.msra.mxu0 0.0
    %1199 = vmatprep.subr.mxu0 0.0
    %1200 = vmatpush1.msra.mxu0 0.0
    %1201 = vmatprep.subr.mxu0 0.0
    %1202 = vmatpush1.msra.mxu0 0.0
    %1203 = vmatprep.mubr.f32.mxu0 0.0
    %v1204 = vand.u32 %v696, 4294901760
    %1205 = vmatmul.mubr.f32.gmra.mrb[0].mxu0 %v1204
    %v1206 = vpop.f32.mrb[0].mxu0
    %v1207 = vadd.f32 %v1100, %v1206
    %v1208 = vpop.f32.mrb[0].mxu0
    %1209 = vmatprep.mubr.f32.mxu0 0.0
    %v1210 = vand.u32 %v699, 4294901760
    %1211 = vmatmul.mubr.f32.gmra.mrb[0].mxu0 %v1210
    %v1212 = vpop.f32.mrb[0].mxu0
    %v1213 = vadd.f32 %v1108, %v1212
    %v1214 = vpop.f32.mrb[0].mxu0
    %1215 = vmatprep.mubr.f32.mxu0 0.0
    %v1216 = vand.u32 %v702, 4294901760
    %1217 = vmatmul.mubr.f32.gmra.mrb[0].mxu0 %v1216
    %v1218 = vpop.f32.mrb[0].mxu0
    %v1219 = vadd.f32 %v1116, %v1218
    %v1220 = vpop.f32.mrb[0].mxu0
    %1221 = vmatprep.mubr.f32.mxu0 0.0
    %v1222 = vand.u32 %v705, 4294901760
    %1223 = vmatmul.mubr.f32.gmra.mrb[0].mxu0 %v1222
    %v1224 = vpop.f32.mrb[0].mxu0
    %v1225 = vadd.f32 %v1124, %v1224
    %v1226 = vpop.f32.mrb[0].mxu0
    %1227 = vdwg.mxu0
    %1228 = vmatprep.subr.mxu0 0.0
    %v1229 = vand.u32 %v662, 4294901760
    %1230 = vmatpush1.msra.mxu0 %v1229
    %1231 = vmatprep.subr.mxu0 0.0
    %v1232 = vand.u32 %v663, 4294901760
    %1233 = vmatpush1.msra.mxu0 %v1232
    %1234 = vmatprep.subr.mxu0 0.0
    %v1235 = vand.u32 %v664, 4294901760
    %1236 = vmatpush1.msra.mxu0 %v1235
    %1237 = vmatprep.subr.mxu0 0.0
    %v1238 = vand.u32 %v665, 4294901760
    %1239 = vmatpush1.msra.mxu0 %v1238
    %1240 = vmatprep.subr.mxu0 0.0
    %1241 = vmatpush1.msra.mxu0 0.0
    %1242 = vmatprep.subr.mxu0 0.0
    %1243 = vmatpush1.msra.mxu0 0.0
    %1244 = vmatprep.subr.mxu0 0.0
    %1245 = vmatpush1.msra.mxu0 0.0
    %1246 = vmatprep.subr.mxu0 0.0
    %1247 = vmatpush1.msra.mxu0 0.0
    %1248 = vmatprep.subr.mxu0 0.0
    %1249 = vmatpush1.msra.mxu0 0.0
    %1250 = vmatprep.subr.mxu0 0.0
    %1251 = vmatpush1.msra.mxu0 0.0
    %1252 = vmatprep.subr.mxu0 0.0
    %1253 = vmatpush1.msra.mxu0 0.0
    %1254 = vmatprep.subr.mxu0 0.0
    %1255 = vmatpush1.msra.mxu0 0.0
    %1256 = vmatprep.subr.mxu0 0.0
    %1257 = vmatpush1.msra.mxu0 0.0
    %1258 = vmatprep.subr.mxu0 0.0
    %1259 = vmatpush1.msra.mxu0 0.0
    %1260 = vmatprep.subr.mxu0 0.0
    %1261 = vmatpush1.msra.mxu0 0.0
    %1262 = vmatprep.subr.mxu0 0.0
    %1263 = vmatpush1.msra.mxu0 0.0
    %1264 = vmatprep.subr.mxu0 0.0
    %1265 = vmatpush1.msra.mxu0 0.0
    %1266 = vmatprep.subr.mxu0 0.0
    %1267 = vmatpush1.msra.mxu0 0.0
    %1268 = vmatprep.subr.mxu0 0.0
    %1269 = vmatpush1.msra.mxu0 0.0
    %1270 = vmatprep.subr.mxu0 0.0
    %1271 = vmatpush1.msra.mxu0 0.0
    %1272 = vmatprep.subr.mxu0 0.0
    %1273 = vmatpush1.msra.mxu0 0.0
    %1274 = vmatprep.subr.mxu0 0.0
    %1275 = vmatpush1.msra.mxu0 0.0
    %1276 = vmatprep.subr.mxu0 0.0
    %1277 = vmatpush1.msra.mxu0 0.0
    %1278 = vmatprep.subr.mxu0 0.0
    %1279 = vmatpush1.msra.mxu0 0.0
    %1280 = vmatprep.subr.mxu0 0.0
    %1281 = vmatpush1.msra.mxu0 0.0
    %1282 = vmatprep.subr.mxu0 0.0
    %1283 = vmatpush1.msra.mxu0 0.0
    %1284 = vmatprep.subr.mxu0 0.0
    %1285 = vmatpush1.msra.mxu0 0.0
    %1286 = vmatprep.subr.mxu0 0.0
    %1287 = vmatpush1.msra.mxu0 0.0
    %1288 = vmatprep.subr.mxu0 0.0
    %1289 = vmatpush1.msra.mxu0 0.0
    %1290 = vmatprep.subr.mxu0 0.0
    %1291 = vmatpush1.msra.mxu0 0.0
    %1292 = vmatprep.subr.mxu0 0.0
    %1293 = vmatpush1.msra.mxu0 0.0
    %1294 = vmatprep.subr.mxu0 0.0
    %1295 = vmatpush1.msra.mxu0 0.0
    %1296 = vmatprep.mubr.f32.mxu0 0.0
    %v1297 = vand.u32 %v696, 4294901760
    %1298 = vmatmul.mubr.f32.gmra.mrb[0].mxu0 %v1297
    %v1299 = vpop.f32.mrb[0].mxu0
    %v1300 = vadd.f32 %v1207, %v1299
    %v1301 = vpop.f32.mrb[0].mxu0
    %1302 = vmatprep.mubr.f32.mxu0 0.0
    %v1303 = vand.u32 %v699, 4294901760
    %1304 = vmatmul.mubr.f32.gmra.mrb[0].mxu0 %v1303
    %v1305 = vpop.f32.mrb[0].mxu0
    %v1306 = vadd.f32 %v1213, %v1305
    %v1307 = vpop.f32.mrb[0].mxu0
    %1308 = vmatprep.mubr.f32.mxu0 0.0
    %v1309 = vand.u32 %v702, 4294901760
    %1310 = vmatmul.mubr.f32.gmra.mrb[0].mxu0 %v1309
    %v1311 = vpop.f32.mrb[0].mxu0
    %v1312 = vadd.f32 %v1219, %v1311
    %v1313 = vpop.f32.mrb[0].mxu0
    %1314 = vmatprep.mubr.f32.mxu0 0.0
    %v1315 = vand.u32 %v705, 4294901760
    %1316 = vmatmul.mubr.f32.gmra.mrb[0].mxu0 %v1315
    %v1317 = vpop.f32.mrb[0].mxu0
    %v1318 = vadd.f32 %v1225, %v1317
    %v1319 = vpop.f32.mrb[0].mxu0
    %1320 = vdwg.mxu0
    %v1321 = vmax.f32 %v1300, 0.0
    %v1322 = vmax.f32 %v1306, 0.0
    %v1323 = vmax.f32 %v1312, 0.0
    %v1324 = vmax.f32 %v1318, 0.0
    %v1325 = vld [vmem:[%s5] sm:$0xff]
    %v1326 = vld [vmem:[%s6] sm:$0xff]
    %1328 = vset.pattern.permute.xlu0 0
    %1329 = vperm.xlu0 %1328, %v1326
    %v1330 = vpop.permute.xlu0 %1329
    %v1333 = vsel %vm694, %v1325, 0
    %1335 = vmatprep.subr.mxu0 0.0
    %v1336 = vand.u32 %v1321, 4294901760
    %1337 = vmatpush1.msra.mxu0 %v1336
    %1338 = vmatprep.subr.mxu0 0.0
    %v1339 = vand.u32 %v1322, 4294901760
    %1340 = vmatpush1.msra.mxu0 %v1339
    %1341 = vmatprep.subr.mxu0 0.0
    %v1342 = vand.u32 %v1323, 4294901760
    %1343 = vmatpush1.msra.mxu0 %v1342
    %1344 = vmatprep.subr.mxu0 0.0
    %v1345 = vand.u32 %v1324, 4294901760
    %1346 = vmatpush1.msra.mxu0 %v1345
    %1347 = vmatprep.subr.mxu0 0.0
    %1348 = vmatpush1.msra.mxu0 0.0
    %1349 = vmatprep.subr.mxu0 0.0
    %1350 = vmatpush1.msra.mxu0 0.0
    %1351 = vmatprep.subr.mxu0 0.0
    %1352 = vmatpush1.msra.mxu0 0.0
    %1353 = vmatprep.subr.mxu0 0.0
    %1354 = vmatpush1.msra.mxu0 0.0
    %1355 = vmatprep.subr.mxu0 0.0
    %1356 = vmatpush1.msra.mxu0 0.0
    %1357 = vmatprep.subr.mxu0 0.0
    %1358 = vmatpush1.msra.mxu0 0.0
    %1359 = vmatprep.subr.mxu0 0.0
    %1360 = vmatpush1.msra.mxu0 0.0
    %1361 = vmatprep.subr.mxu0 0.0
    %1362 = vmatpush1.msra.mxu0 0.0
    %1363 = vmatprep.subr.mxu0 0.0
    %1364 = vmatpush1.msra.mxu0 0.0
    %1365 = vmatprep.subr.mxu0 0.0
    %1366 = vmatpush1.msra.mxu0 0.0
    %1367 = vmatprep.subr.mxu0 0.0
    %1368 = vmatpush1.msra.mxu0 0.0
    %1369 = vmatprep.subr.mxu0 0.0
    %1370 = vmatpush1.msra.mxu0 0.0
    %1371 = vmatprep.subr.mxu0 0.0
    %1372 = vmatpush1.msra.mxu0 0.0
    %1373 = vmatprep.subr.mxu0 0.0
    %1374 = vmatpush1.msra.mxu0 0.0
    %1375 = vmatprep.subr.mxu0 0.0
    %1376 = vmatpush1.msra.mxu0 0.0
    %1377 = vmatprep.subr.mxu0 0.0
    %1378 = vmatpush1.msra.mxu0 0.0
    %1379 = vmatprep.subr.mxu0 0.0
    %1380 = vmatpush1.msra.mxu0 0.0
    %1381 = vmatprep.subr.mxu0 0.0
    %1382 = vmatpush1.msra.mxu0 0.0
    %1383 = vmatprep.subr.mxu0 0.0
    %1384 = vmatpush1.msra.mxu0 0.0
    %1385 = vmatprep.subr.mxu0 0.0
    %1386 = vmatpush1.msra.mxu0 0.0
    %1387 = vmatprep.subr.mxu0 0.0
    %1388 = vmatpush1.msra.mxu0 0.0
    %1389 = vmatprep.subr.mxu0 0.0
    %1390 = vmatpush1.msra.mxu0 0.0
    %1391 = vmatprep.subr.mxu0 0.0
    %1392 = vmatpush1.msra.mxu0 0.0
    %1393 = vmatprep.subr.mxu0 0.0
    %1394 = vmatpush1.msra.mxu0 0.0
    %1395 = vmatprep.subr.mxu0 0.0
    %1396 = vmatpush1.msra.mxu0 0.0
    %1397 = vmatprep.subr.mxu0 0.0
    %1398 = vmatpush1.msra.mxu0 0.0
    %1399 = vmatprep.subr.mxu0 0.0
    %1400 = vmatpush1.msra.mxu0 0.0
    %1401 = vmatprep.subr.mxu0 0.0
    %1402 = vmatpush1.msra.mxu0 0.0
    %1403 = vmatprep.mubr.f32.mxu0 0.0
    %v1404 = vand.u32 %v1333, 4294901760
    %v1405 = vsub.f32 %v1333, %v1404
    %v1406 = vand.u32 %v1405, 4294901760
    %v1407 = vsub.f32 %v1405, %v1406
    %v1408 = vand.u32 %v1407, 4294901760
    %1409 = vmatmul.mubr.f32.gmra.mrb[0].mxu0 %v1408
    %v1410 = vpop.f32.mrb[0].mxu0
    %v1411 = vadd.f32 %v1330, %v1410
    %v1412 = vpop.f32.mrb[0].mxu0
    %1413 = vdwg.mxu0
    %1414 = vmatprep.subr.mxu0 0.0
    %v1415 = vand.u32 %v1321, 4294901760
    %v1416 = vsub.f32 %v1321, %v1415
    %v1417 = vand.u32 %v1416, 4294901760
    %v1418 = vsub.f32 %v1416, %v1417
    %v1419 = vand.u32 %v1418, 4294901760
    %1420 = vmatpush1.msra.mxu0 %v1419
    %1421 = vmatprep.subr.mxu0 0.0
    %v1422 = vand.u32 %v1322, 4294901760
    %v1423 = vsub.f32 %v1322, %v1422
    %v1424 = vand.u32 %v1423, 4294901760
    %v1425 = vsub.f32 %v1423, %v1424
    %v1426 = vand.u32 %v1425, 4294901760
    %1427 = vmatpush1.msra.mxu0 %v1426
    %1428 = vmatprep.subr.mxu0 0.0
    %v1429 = vand.u32 %v1323, 4294901760
    %v1430 = vsub.f32 %v1323, %v1429
    %v1431 = vand.u32 %v1430, 4294901760
    %v1432 = vsub.f32 %v1430, %v1431
    %v1433 = vand.u32 %v1432, 4294901760
    %1434 = vmatpush1.msra.mxu0 %v1433
    %1435 = vmatprep.subr.mxu0 0.0
    %v1436 = vand.u32 %v1324, 4294901760
    %v1437 = vsub.f32 %v1324, %v1436
    %v1438 = vand.u32 %v1437, 4294901760
    %v1439 = vsub.f32 %v1437, %v1438
    %v1440 = vand.u32 %v1439, 4294901760
    %1441 = vmatpush1.msra.mxu0 %v1440
    %1442 = vmatprep.subr.mxu0 0.0
    %1443 = vmatpush1.msra.mxu0 0.0
    %1444 = vmatprep.subr.mxu0 0.0
    %1445 = vmatpush1.msra.mxu0 0.0
    %1446 = vmatprep.subr.mxu0 0.0
    %1447 = vmatpush1.msra.mxu0 0.0
    %1448 = vmatprep.subr.mxu0 0.0
    %1449 = vmatpush1.msra.mxu0 0.0
    %1450 = vmatprep.subr.mxu0 0.0
    %1451 = vmatpush1.msra.mxu0 0.0
    %1452 = vmatprep.subr.mxu0 0.0
    %1453 = vmatpush1.msra.mxu0 0.0
    %1454 = vmatprep.subr.mxu0 0.0
    %1455 = vmatpush1.msra.mxu0 0.0
    %1456 = vmatprep.subr.mxu0 0.0
    %1457 = vmatpush1.msra.mxu0 0.0
    %1458 = vmatprep.subr.mxu0 0.0
    %1459 = vmatpush1.msra.mxu0 0.0
    %1460 = vmatprep.subr.mxu0 0.0
    %1461 = vmatpush1.msra.mxu0 0.0
    %1462 = vmatprep.subr.mxu0 0.0
    %1463 = vmatpush1.msra.mxu0 0.0
    %1464 = vmatprep.subr.mxu0 0.0
    %1465 = vmatpush1.msra.mxu0 0.0
    %1466 = vmatprep.subr.mxu0 0.0
    %1467 = vmatpush1.msra.mxu0 0.0
    %1468 = vmatprep.subr.mxu0 0.0
    %1469 = vmatpush1.msra.mxu0 0.0
    %1470 = vmatprep.subr.mxu0 0.0
    %1471 = vmatpush1.msra.mxu0 0.0
    %1472 = vmatprep.subr.mxu0 0.0
    %1473 = vmatpush1.msra.mxu0 0.0
    %1474 = vmatprep.subr.mxu0 0.0
    %1475 = vmatpush1.msra.mxu0 0.0
    %1476 = vmatprep.subr.mxu0 0.0
    %1477 = vmatpush1.msra.mxu0 0.0
    %1478 = vmatprep.subr.mxu0 0.0
    %1479 = vmatpush1.msra.mxu0 0.0
    %1480 = vmatprep.subr.mxu0 0.0
    %1481 = vmatpush1.msra.mxu0 0.0
    %1482 = vmatprep.subr.mxu0 0.0
    %1483 = vmatpush1.msra.mxu0 0.0
    %1484 = vmatprep.subr.mxu0 0.0
    %1485 = vmatpush1.msra.mxu0 0.0
    %1486 = vmatprep.subr.mxu0 0.0
    %1487 = vmatpush1.msra.mxu0 0.0
    %1488 = vmatprep.subr.mxu0 0.0
    %1489 = vmatpush1.msra.mxu0 0.0
    %1490 = vmatprep.subr.mxu0 0.0
    %1491 = vmatpush1.msra.mxu0 0.0
    %1492 = vmatprep.subr.mxu0 0.0
    %1493 = vmatpush1.msra.mxu0 0.0
    %1494 = vmatprep.subr.mxu0 0.0
    %1495 = vmatpush1.msra.mxu0 0.0
    %1496 = vmatprep.subr.mxu0 0.0
    %1497 = vmatpush1.msra.mxu0 0.0
    %1498 = vmatprep.mubr.f32.mxu0 0.0
    %v1499 = vand.u32 %v1333, 4294901760
    %1500 = vmatmul.mubr.f32.gmra.mrb[0].mxu0 %v1499
    %v1501 = vpop.f32.mrb[0].mxu0
    %v1502 = vadd.f32 %v1411, %v1501
    %v1503 = vpop.f32.mrb[0].mxu0
    %1504 = vdwg.mxu0
    %1505 = vmatprep.subr.mxu0 0.0
    %v1506 = vand.u32 %v1321, 4294901760
    %v1507 = vsub.f32 %v1321, %v1506
    %1508 = vmatpush1.msra.mxu0 %v1507
    %1509 = vmatprep.subr.mxu0 0.0
    %v1510 = vand.u32 %v1322, 4294901760
    %v1511 = vsub.f32 %v1322, %v1510
    %1512 = vmatpush1.msra.mxu0 %v1511
    %1513 = vmatprep.subr.mxu0 0.0
    %v1514 = vand.u32 %v1323, 4294901760
    %v1515 = vsub.f32 %v1323, %v1514
    %1516 = vmatpush1.msra.mxu0 %v1515
    %1517 = vmatprep.subr.mxu0 0.0
    %v1518 = vand.u32 %v1324, 4294901760
    %v1519 = vsub.f32 %v1324, %v1518
    %1520 = vmatpush1.msra.mxu0 %v1519
    %1521 = vmatprep.subr.mxu0 0.0
    %1522 = vmatpush1.msra.mxu0 0.0
    %1523 = vmatprep.subr.mxu0 0.0
    %1524 = vmatpush1.msra.mxu0 0.0
    %1525 = vmatprep.subr.mxu0 0.0
    %1526 = vmatpush1.msra.mxu0 0.0
    %1527 = vmatprep.subr.mxu0 0.0
    %1528 = vmatpush1.msra.mxu0 0.0
    %1529 = vmatprep.subr.mxu0 0.0
    %1530 = vmatpush1.msra.mxu0 0.0
    %1531 = vmatprep.subr.mxu0 0.0
    %1532 = vmatpush1.msra.mxu0 0.0
    %1533 = vmatprep.subr.mxu0 0.0
    %1534 = vmatpush1.msra.mxu0 0.0
    %1535 = vmatprep.subr.mxu0 0.0
    %1536 = vmatpush1.msra.mxu0 0.0
    %1537 = vmatprep.subr.mxu0 0.0
    %1538 = vmatpush1.msra.mxu0 0.0
    %1539 = vmatprep.subr.mxu0 0.0
    %1540 = vmatpush1.msra.mxu0 0.0
    %1541 = vmatprep.subr.mxu0 0.0
    %1542 = vmatpush1.msra.mxu0 0.0
    %1543 = vmatprep.subr.mxu0 0.0
    %1544 = vmatpush1.msra.mxu0 0.0
    %1545 = vmatprep.subr.mxu0 0.0
    %1546 = vmatpush1.msra.mxu0 0.0
    %1547 = vmatprep.subr.mxu0 0.0
    %1548 = vmatpush1.msra.mxu0 0.0
    %1549 = vmatprep.subr.mxu0 0.0
    %1550 = vmatpush1.msra.mxu0 0.0
    %1551 = vmatprep.subr.mxu0 0.0
    %1552 = vmatpush1.msra.mxu0 0.0
    %1553 = vmatprep.subr.mxu0 0.0
    %1554 = vmatpush1.msra.mxu0 0.0
    %1555 = vmatprep.subr.mxu0 0.0
    %1556 = vmatpush1.msra.mxu0 0.0
    %1557 = vmatprep.subr.mxu0 0.0
    %1558 = vmatpush1.msra.mxu0 0.0
    %1559 = vmatprep.subr.mxu0 0.0
    %1560 = vmatpush1.msra.mxu0 0.0
    %1561 = vmatprep.subr.mxu0 0.0
    %1562 = vmatpush1.msra.mxu0 0.0
    %1563 = vmatprep.subr.mxu0 0.0
    %1564 = vmatpush1.msra.mxu0 0.0
    %1565 = vmatprep.subr.mxu0 0.0
    %1566 = vmatpush1.msra.mxu0 0.0
    %1567 = vmatprep.subr.mxu0 0.0
    %1568 = vmatpush1.msra.mxu0 0.0
    %1569 = vmatprep.subr.mxu0 0.0
    %1570 = vmatpush1.msra.mxu0 0.0
    %1571 = vmatprep.subr.mxu0 0.0
    %1572 = vmatpush1.msra.mxu0 0.0
    %1573 = vmatprep.subr.mxu0 0.0
    %1574 = vmatpush1.msra.mxu0 0.0
    %1575 = vmatprep.subr.mxu0 0.0
    %1576 = vmatpush1.msra.mxu0 0.0
    %1577 = vmatprep.mubr.f32.mxu0 0.0
    %v1578 = vand.u32 %v1333, 4294901760
    %v1579 = vsub.f32 %v1333, %v1578
    %1580 = vmatmul.mubr.f32.gmra.mrb[0].mxu0 %v1579
    %v1581 = vpop.f32.mrb[0].mxu0
    %v1582 = vadd.f32 %v1502, %v1581
    %v1583 = vpop.f32.mrb[0].mxu0
    %1584 = vdwg.mxu0
    %1585 = vmatprep.subr.mxu0 0.0
    %v1586 = vand.u32 %v1321, 4294901760
    %1587 = vmatpush1.msra.mxu0 %v1586
    %1588 = vmatprep.subr.mxu0 0.0
    %v1589 = vand.u32 %v1322, 4294901760
    %1590 = vmatpush1.msra.mxu0 %v1589
    %1591 = vmatprep.subr.mxu0 0.0
    %v1592 = vand.u32 %v1323, 4294901760
    %1593 = vmatpush1.msra.mxu0 %v1592
    %1594 = vmatprep.subr.mxu0 0.0
    %v1595 = vand.u32 %v1324, 4294901760
    %1596 = vmatpush1.msra.mxu0 %v1595
    %1597 = vmatprep.subr.mxu0 0.0
    %1598 = vmatpush1.msra.mxu0 0.0
    %1599 = vmatprep.subr.mxu0 0.0
    %1600 = vmatpush1.msra.mxu0 0.0
    %1601 = vmatprep.subr.mxu0 0.0
    %1602 = vmatpush1.msra.mxu0 0.0
    %1603 = vmatprep.subr.mxu0 0.0
    %1604 = vmatpush1.msra.mxu0 0.0
    %1605 = vmatprep.subr.mxu0 0.0
    %1606 = vmatpush1.msra.mxu0 0.0
    %1607 = vmatprep.subr.mxu0 0.0
    %1608 = vmatpush1.msra.mxu0 0.0
    %1609 = vmatprep.subr.mxu0 0.0
    %1610 = vmatpush1.msra.mxu0 0.0
    %1611 = vmatprep.subr.mxu0 0.0
    %1612 = vmatpush1.msra.mxu0 0.0
    %1613 = vmatprep.subr.mxu0 0.0
    %1614 = vmatpush1.msra.mxu0 0.0
    %1615 = vmatprep.subr.mxu0 0.0
    %1616 = vmatpush1.msra.mxu0 0.0
    %1617 = vmatprep.subr.mxu0 0.0
    %1618 = vmatpush1.msra.mxu0 0.0
    %1619 = vmatprep.subr.mxu0 0.0
    %1620 = vmatpush1.msra.mxu0 0.0
    %1621 = vmatprep.subr.mxu0 0.0
    %1622 = vmatpush1.msra.mxu0 0.0
    %1623 = vmatprep.subr.mxu0 0.0
    %1624 = vmatpush1.msra.mxu0 0.0
    %1625 = vmatprep.subr.mxu0 0.0
    %1626 = vmatpush1.msra.mxu0 0.0
    %1627 = vmatprep.subr.mxu0 0.0
    %1628 = vmatpush1.msra.mxu0 0.0
    %1629 = vmatprep.subr.mxu0 0.0
    %1630 = vmatpush1.msra.mxu0 0.0
    %1631 = vmatprep.subr.mxu0 0.0
    %1632 = vmatpush1.msra.mxu0 0.0
    %1633 = vmatprep.subr.mxu0 0.0
    %1634 = vmatpush1.msra.mxu0 0.0
    %1635 = vmatprep.subr.mxu0 0.0
    %1636 = vmatpush1.msra.mxu0 0.0
    %1637 = vmatprep.subr.mxu0 0.0
    %1638 = vmatpush1.msra.mxu0 0.0
    %1639 = vmatprep.subr.mxu0 0.0
    %1640 = vmatpush1.msra.mxu0 0.0
    %1641 = vmatprep.subr.mxu0 0.0
    %1642 = vmatpush1.msra.mxu0 0.0
    %1643 = vmatprep.subr.mxu0 0.0
    %1644 = vmatpush1.msra.mxu0 0.0
    %1645 = vmatprep.subr.mxu0 0.0
    %1646 = vmatpush1.msra.mxu0 0.0
    %1647 = vmatprep.subr.mxu0 0.0
    %1648 = vmatpush1.msra.mxu0 0.0
    %1649 = vmatprep.subr.mxu0 0.0
    %1650 = vmatpush1.msra.mxu0 0.0
    %1651 = vmatprep.subr.mxu0 0.0
    %1652 = vmatpush1.msra.mxu0 0.0
    %1653 = vmatprep.mubr.f32.mxu0 0.0
    %v1654 = vand.u32 %v1333, 4294901760
    %v1655 = vsub.f32 %v1333, %v1654
    %v1656 = vand.u32 %v1655, 4294901760
    %1657 = vmatmul.mubr.f32.gmra.mrb[0].mxu0 %v1656
    %v1658 = vpop.f32.mrb[0].mxu0
    %v1659 = vadd.f32 %v1582, %v1658
    %v1660 = vpop.f32.mrb[0].mxu0
    %1661 = vdwg.mxu0
    %1662 = vmatprep.subr.mxu0 0.0
    %v1663 = vand.u32 %v1321, 4294901760
    %v1664 = vsub.f32 %v1321, %v1663
    %v1665 = vand.u32 %v1664, 4294901760
    %1666 = vmatpush1.msra.mxu0 %v1665
    %1667 = vmatprep.subr.mxu0 0.0
    %v1668 = vand.u32 %v1322, 4294901760
    %v1669 = vsub.f32 %v1322, %v1668
    %v1670 = vand.u32 %v1669, 4294901760
    %1671 = vmatpush1.msra.mxu0 %v1670
    %1672 = vmatprep.subr.mxu0 0.0
    %v1673 = vand.u32 %v1323, 4294901760
    %v1674 = vsub.f32 %v1323, %v1673
    %v1675 = vand.u32 %v1674, 4294901760
    %1676 = vmatpush1.msra.mxu0 %v1675
    %1677 = vmatprep.subr.mxu0 0.0
    %v1678 = vand.u32 %v1324, 4294901760
    %v1679 = vsub.f32 %v1324, %v1678
    %v1680 = vand.u32 %v1679, 4294901760
    %1681 = vmatpush1.msra.mxu0 %v1680
    %1682 = vmatprep.subr.mxu0 0.0
    %1683 = vmatpush1.msra.mxu0 0.0
    %1684 = vmatprep.subr.mxu0 0.0
    %1685 = vmatpush1.msra.mxu0 0.0
    %1686 = vmatprep.subr.mxu0 0.0
    %1687 = vmatpush1.msra.mxu0 0.0
    %1688 = vmatprep.subr.mxu0 0.0
    %1689 = vmatpush1.msra.mxu0 0.0
    %1690 = vmatprep.subr.mxu0 0.0
    %1691 = vmatpush1.msra.mxu0 0.0
    %1692 = vmatprep.subr.mxu0 0.0
    %1693 = vmatpush1.msra.mxu0 0.0
    %1694 = vmatprep.subr.mxu0 0.0
    %1695 = vmatpush1.msra.mxu0 0.0
    %1696 = vmatprep.subr.mxu0 0.0
    %1697 = vmatpush1.msra.mxu0 0.0
    %1698 = vmatprep.subr.mxu0 0.0
    %1699 = vmatpush1.msra.mxu0 0.0
    %1700 = vmatprep.subr.mxu0 0.0
    %1701 = vmatpush1.msra.mxu0 0.0
    %1702 = vmatprep.subr.mxu0 0.0
    %1703 = vmatpush1.msra.mxu0 0.0
    %1704 = vmatprep.subr.mxu0 0.0
    %1705 = vmatpush1.msra.mxu0 0.0
    %1706 = vmatprep.subr.mxu0 0.0
    %1707 = vmatpush1.msra.mxu0 0.0
    %1708 = vmatprep.subr.mxu0 0.0
    %1709 = vmatpush1.msra.mxu0 0.0
    %1710 = vmatprep.subr.mxu0 0.0
    %1711 = vmatpush1.msra.mxu0 0.0
    %1712 = vmatprep.subr.mxu0 0.0
    %1713 = vmatpush1.msra.mxu0 0.0
    %1714 = vmatprep.subr.mxu0 0.0
    %1715 = vmatpush1.msra.mxu0 0.0
    %1716 = vmatprep.subr.mxu0 0.0
    %1717 = vmatpush1.msra.mxu0 0.0
    %1718 = vmatprep.subr.mxu0 0.0
    %1719 = vmatpush1.msra.mxu0 0.0
    %1720 = vmatprep.subr.mxu0 0.0
    %1721 = vmatpush1.msra.mxu0 0.0
    %1722 = vmatprep.subr.mxu0 0.0
    %1723 = vmatpush1.msra.mxu0 0.0
    %1724 = vmatprep.subr.mxu0 0.0
    %1725 = vmatpush1.msra.mxu0 0.0
    %1726 = vmatprep.subr.mxu0 0.0
    %1727 = vmatpush1.msra.mxu0 0.0
    %1728 = vmatprep.subr.mxu0 0.0
    %1729 = vmatpush1.msra.mxu0 0.0
    %1730 = vmatprep.subr.mxu0 0.0
    %1731 = vmatpush1.msra.mxu0 0.0
    %1732 = vmatprep.subr.mxu0 0.0
    %1733 = vmatpush1.msra.mxu0 0.0
    %1734 = vmatprep.subr.mxu0 0.0
    %1735 = vmatpush1.msra.mxu0 0.0
    %1736 = vmatprep.subr.mxu0 0.0
    %1737 = vmatpush1.msra.mxu0 0.0
    %1738 = vmatprep.mubr.f32.mxu0 0.0
    %v1739 = vand.u32 %v1333, 4294901760
    %1740 = vmatmul.mubr.f32.gmra.mrb[0].mxu0 %v1739
    %v1741 = vpop.f32.mrb[0].mxu0
    %v1742 = vadd.f32 %v1659, %v1741
    %v1743 = vpop.f32.mrb[0].mxu0
    %1744 = vdwg.mxu0
    %1745 = vmatprep.subr.mxu0 0.0
    %v1746 = vand.u32 %v1321, 4294901760
    %1747 = vmatpush1.msra.mxu0 %v1746
    %1748 = vmatprep.subr.mxu0 0.0
    %v1749 = vand.u32 %v1322, 4294901760
    %1750 = vmatpush1.msra.mxu0 %v1749
    %1751 = vmatprep.subr.mxu0 0.0
    %v1752 = vand.u32 %v1323, 4294901760
    %1753 = vmatpush1.msra.mxu0 %v1752
    %1754 = vmatprep.subr.mxu0 0.0
    %v1755 = vand.u32 %v1324, 4294901760
    %1756 = vmatpush1.msra.mxu0 %v1755
    %1757 = vmatprep.subr.mxu0 0.0
    %1758 = vmatpush1.msra.mxu0 0.0
    %1759 = vmatprep.subr.mxu0 0.0
    %1760 = vmatpush1.msra.mxu0 0.0
    %1761 = vmatprep.subr.mxu0 0.0
    %1762 = vmatpush1.msra.mxu0 0.0
    %1763 = vmatprep.subr.mxu0 0.0
    %1764 = vmatpush1.msra.mxu0 0.0
    %1765 = vmatprep.subr.mxu0 0.0
    %1766 = vmatpush1.msra.mxu0 0.0
    %1767 = vmatprep.subr.mxu0 0.0
    %1768 = vmatpush1.msra.mxu0 0.0
    %1769 = vmatprep.subr.mxu0 0.0
    %1770 = vmatpush1.msra.mxu0 0.0
    %1771 = vmatprep.subr.mxu0 0.0
    %1772 = vmatpush1.msra.mxu0 0.0
    %1773 = vmatprep.subr.mxu0 0.0
    %1774 = vmatpush1.msra.mxu0 0.0
    %1775 = vmatprep.subr.mxu0 0.0
    %1776 = vmatpush1.msra.mxu0 0.0
    %1777 = vmatprep.subr.mxu0 0.0
    %1778 = vmatpush1.msra.mxu0 0.0
    %1779 = vmatprep.subr.mxu0 0.0
    %1780 = vmatpush1.msra.mxu0 0.0
    %1781 = vmatprep.subr.mxu0 0.0
    %1782 = vmatpush1.msra.mxu0 0.0
    %1783 = vmatprep.subr.mxu0 0.0
    %1784 = vmatpush1.msra.mxu0 0.0
    %1785 = vmatprep.subr.mxu0 0.0
    %1786 = vmatpush1.msra.mxu0 0.0
    %1787 = vmatprep.subr.mxu0 0.0
    %1788 = vmatpush1.msra.mxu0 0.0
    %1789 = vmatprep.subr.mxu0 0.0
    %1790 = vmatpush1.msra.mxu0 0.0
    %1791 = vmatprep.subr.mxu0 0.0
    %1792 = vmatpush1.msra.mxu0 0.0
    %1793 = vmatprep.subr.mxu0 0.0
    %1794 = vmatpush1.msra.mxu0 0.0
    %1795 = vmatprep.subr.mxu0 0.0
    %1796 = vmatpush1.msra.mxu0 0.0
    %1797 = vmatprep.subr.mxu0 0.0
    %1798 = vmatpush1.msra.mxu0 0.0
    %1799 = vmatprep.subr.mxu0 0.0
    %1800 = vmatpush1.msra.mxu0 0.0
    %1801 = vmatprep.subr.mxu0 0.0
    %1802 = vmatpush1.msra.mxu0 0.0
    %1803 = vmatprep.subr.mxu0 0.0
    %1804 = vmatpush1.msra.mxu0 0.0
    %1805 = vmatprep.subr.mxu0 0.0
    %1806 = vmatpush1.msra.mxu0 0.0
    %1807 = vmatprep.subr.mxu0 0.0
    %1808 = vmatpush1.msra.mxu0 0.0
    %1809 = vmatprep.subr.mxu0 0.0
    %1810 = vmatpush1.msra.mxu0 0.0
    %1811 = vmatprep.subr.mxu0 0.0
    %1812 = vmatpush1.msra.mxu0 0.0
    %1813 = vmatprep.mubr.f32.mxu0 0.0
    %v1814 = vand.u32 %v1333, 4294901760
    %1815 = vmatmul.mubr.f32.gmra.mrb[0].mxu0 %v1814
    %v1816 = vpop.f32.mrb[0].mxu0
    %v1817 = vadd.f32 %v1742, %v1816
    %v1818 = vpop.f32.mrb[0].mxu0
    %1819 = vdwg.mxu0
    %v1820 = vlaneseq
    %v1821 = vshrl.u32 %v1820, 7
    %vm1822 = vcmp.ge.s32.totalorder %v1821, 4
    %v1823 = vmax.f32 %v1817, -5.0
    %v1824 = vmin.f32 %v1823, 5.0
    %v1825 = vsel %vm1822, %v1824, %v1817
    %1826 = vst [vmem:[#allocation2] sm:$0xff] %v1825
    // Predicated region
    $region30: #{tpu_custom_call.1} parent=1 // pred_check
      _
    $region31: #{tpu_custom_call.1} parent=1 // pred_check_branch
      %1828 = sbr.rel (0) target = $region33
    $region32: #{tpu_custom_call.1} parent=1 // pred_region
      %s1830 = ssub.s32 128, 128
      %1831 = vsyncadd [#allocation3], %s1830
      %s1833 = sshll.u32 [#allocation2], 4
      %s1834 = int_to_ptr.vmem [resolvable:$true] %s1833
      %1836 = dma.vmem_to_hbm [thread:$0]  %s1834, 128, %s7, [#allocation3]
    $region33: #{tpu_custom_call.1} parent=1 // pred_fallthru
      _
    // Predicated region
    $region34: #{tpu_custom_call.1} parent=1 // pred_check
      _
    $region35: #{tpu_custom_call.1} parent=1 // pred_check_branch
      %1838 = sbr.rel (0) target = $region37
    $region36: #{tpu_custom_call.1} parent=1 // pred_region
      %1839 = dma.done [#allocation3], 128
    $region37: #{tpu_custom_call.1} parent=1 // pred_fallthru
      _
    %1840 = vsyncpa [#allocation3], 1

</llo_original>
